<compile_context>
chip_gen: v5e
topology: v5e:2x2
jax: 0.10.0
libtpu: 0.0.40
codegen_flags: <defaults>
</compile_context>

<pallas_src>
import jax
import jax.numpy as jnp
from jax import lax
from jax.experimental import pallas as pl
from jax.experimental.pallas import tpu as pltpu

# Module hyper-parameters (from chp5/ffnnlm.py)
CONTEXT_SIZE = 2
EMBEDDING_DIM = 64
HIDDEN_DIM = 128
VOCAB_SIZE = 256      # small synthetic vocab (multiple of 128 for lane density)
BATCH = 512           # 4 grid steps at BLOCK_M=128 -> >=2 pipelined tiles per v7x core
BLOCK_M = 128         # fills the MXU M dim; use 256 on single-TC v5e/v6e

IN_DIM = CONTEXT_SIZE * EMBEDDING_DIM        # 128 = K of linear1
STACKED_V = CONTEXT_SIZE * VOCAB_SIZE        # 512 = K of the fused gather matmul


def ffnnlm_kernel(ids_ref, emb_ref, w1_ref, b1_ref, w2_ref, b2_ref, out_ref):
    """Fused: embedding gather -> relu(x@W1+b1) -> @W2+b2 -> log_softmax(dim=1)."""
    bm = ids_ref.shape[0]                               # batch tile (BLOCK_M)
    ids = ids_ref[...]                                  # (BM, C) int32

    # --- embedding gather: ONE offset-one-hot matmul on the MXU ---------------
    # Column c*V + ids[:, c] is hot; against the block-diagonal stacked table
    # (C*V, C*E) this yields exactly concat_c(table[ids[:, c]]), i.e.
    # embeddings(inputs).view(B, -1), with no in-kernel reshape/concat.
    # One-hot entries are exact 0/1 in bf16, so `embeds` equals the bf16-rounded
    # table rows bit-exactly (f32 accumulation only ever adds exact zeros).
    # NOTE: an out-of-range id silently produces an all-zero row instead of
    # nn.Embedding's error; clamp / pl.debug_check upstream if ids aren't trusted.
    col = lax.broadcasted_iota(jnp.int32, (bm, STACKED_V), 1)
    hot = col == ids[:, 0:1]
    for c in range(1, CONTEXT_SIZE):                    # static, C == 2
        hot = hot | (col == ids[:, c:c + 1] + c * VOCAB_SIZE)
    onehot = hot.astype(jnp.bfloat16)                   # (BM, C*V)

    embeds = jnp.dot(onehot, emb_ref[...],
                     preferred_element_type=jnp.float32)          # (BM, C*E=128)

    # --- linear1: single K=128 dot, bias added once, ReLU in f32 (VPU) --------
    h = jnp.dot(embeds.astype(jnp.bfloat16), w1_ref[...],         # lossless cast
                preferred_element_type=jnp.float32) + b1_ref[...]
    h = jnp.maximum(h, 0.0)

    # --- linear2 on MXU (bf16 in, f32 acc) -------------------------------------
    logits = jnp.dot(h.astype(jnp.bfloat16), w2_ref[...],
                     preferred_element_type=jnp.float32) + b2_ref[...]

    # --- numerically-stable log_softmax over dim=1 (fused lse, review item 7) --
    m = jnp.max(logits, axis=1, keepdims=True)
    lse = m + jnp.log(jnp.sum(jnp.exp(logits - m), axis=1, keepdims=True))
    out_ref[...] = logits - lse
    # TODO(synk): emit bf16 here (out_shape dtype + astype) if the NLL consumer
    # upcasts; halves the dominant per-step HBM writeback (review item 8).


def _stack_block_diag(emb_table):
    """(V, E) table -> (C*V, C*E) block-diagonal table for the offset one-hot."""
    v, e = emb_table.shape
    stacked = jnp.zeros((CONTEXT_SIZE * v, CONTEXT_SIZE * e), emb_table.dtype)
    for c in range(CONTEXT_SIZE):
        stacked = stacked.at[c * v:(c + 1) * v, c * e:(c + 1) * e].set(emb_table)
    return stacked


def ffnnlm_forward(inputs, emb_table, w1, b1, w2, b2, *, block_m=BLOCK_M):
    """inputs: (B, CONTEXT_SIZE) int32 token ids. Returns (B, VOCAB) f32 log-probs."""
    B = inputs.shape[0]
    assert B % block_m == 0, "batch must be a multiple of block_m"

    # Cast MXU operands to bf16 once at the call boundary; biases stay f32.
    emb_stacked = _stack_block_diag(emb_table).astype(jnp.bfloat16)  # (C*V, C*E)
    w1_bf16 = w1.astype(jnp.bfloat16)
    w2_bf16 = w2.astype(jnp.bfloat16)

    flops = 2 * B * (STACKED_V * IN_DIM            # offset one-hot gather matmul
                     + IN_DIM * HIDDEN_DIM         # linear1 (single K=128 dot)
                     + HIDDEN_DIM * VOCAB_SIZE)    # linear2
    bytes_accessed = (inputs.size * 4 + emb_stacked.size * 2 + w1_bf16.size * 2
                      + b1.size * 4 + w2_bf16.size * 2 + b2.size * 4
                      + B * VOCAB_SIZE * 4)
    cost = pl.CostEstimate(flops=flops, transcendentals=B * VOCAB_SIZE,
                           bytes_accessed=bytes_accessed)

    return pl.pallas_call(
        ffnnlm_kernel,
        out_shape=jax.ShapeDtypeStruct((B, VOCAB_SIZE), jnp.float32),
        grid=(B // block_m,),
        in_specs=[
            # per-tile token ids (only per-step input DMA besides the output)
            pl.BlockSpec((block_m, CONTEXT_SIZE), lambda i: (i, 0)),
            # weights / stacked table: constant index_map -> DMA'd once, stay
            # VMEM-resident (~0.3 MB total; at 32K vocab single-buffer these with
            # pipeline_mode=pl.Buffered(1) and tile the vocab axis).
            pl.BlockSpec((STACKED_V, IN_DIM), lambda i: (0, 0)),
            pl.BlockSpec((IN_DIM, HIDDEN_DIM), lambda i: (0, 0)),
            pl.BlockSpec((1, HIDDEN_DIM), lambda i: (0, 0)),
            pl.BlockSpec((HIDDEN_DIM, VOCAB_SIZE), lambda i: (0, 0)),
            pl.BlockSpec((1, VOCAB_SIZE), lambda i: (0, 0)),
        ],
        out_specs=pl.BlockSpec((block_m, VOCAB_SIZE), lambda i: (i, 0)),
        compiler_params=pltpu.CompilerParams(
            dimension_semantics=("parallel",)),     # v7x megacore; no-op on v5e/v6e
        cost_estimate=cost,
    )(inputs, emb_stacked, w1_bf16, b1, w2_bf16, b2)


def reference_forward(inputs, emb_table, w1, b1, w2, b2):
    """Pure-JAX f32 reference mirroring the PyTorch module."""
    B = inputs.shape[0]
    embeds = emb_table[inputs].reshape(B, -1)
    h = jnp.maximum(embeds @ w1 + b1, 0.0)
    logits = h @ w2 + b2
    return jax.nn.log_softmax(logits, axis=1)


if __name__ == "__main__":
    key = jax.random.PRNGKey(0)
    k_emb, k_w1, k_b1, k_w2, k_b2, k_in = jax.random.split(key, 6)

    # Deterministic synthetic parameters (shapes from the module __init__).
    emb_table = jax.random.normal(k_emb, (VOCAB_SIZE, EMBEDDING_DIM),
                                  jnp.float32) * 0.1
    # nn.Linear(in, out) weight is (out, in); store pre-transposed (in, out).
    w1 = jax.random.normal(k_w1, (IN_DIM, HIDDEN_DIM), jnp.float32) * 0.05
    b1 = jax.random.normal(k_b1, (1, HIDDEN_DIM), jnp.float32) * 0.01
    w2 = jax.random.normal(k_w2, (HIDDEN_DIM, VOCAB_SIZE), jnp.float32) * 0.05
    b2 = jax.random.normal(k_b2, (1, VOCAB_SIZE), jnp.float32) * 0.01

    inputs = jax.random.randint(k_in, (BATCH, CONTEXT_SIZE), 0, VOCAB_SIZE,
                                dtype=jnp.int32)

    log_probs = ffnnlm_forward(inputs, emb_table, w1, b1, w2, b2)
    log_probs = jax.block_until_ready(log_probs)

    ref = reference_forward(inputs, emb_table, w1, b1, w2, b2)
    assert log_probs.shape == (BATCH, VOCAB_SIZE)
    # bf16 MXU operands with f32 accumulation: tolerance relaxed vs pure f32.
    assert jnp.allclose(log_probs, ref, atol=1e-2, rtol=1e-2), (
        float(jnp.max(jnp.abs(log_probs - ref))))
    # log_softmax sanity: rows exponentiate-sum to 1.
    assert jnp.allclose(jnp.sum(jnp.exp(log_probs), axis=1), 1.0, atol=1e-3)

    print("KERNEL_OK")
</pallas_src>

<mosaic_0001>
module attributes {stable_mosaic.version = 11 : i64} {
  func.func @ffnnlm_kernel(%arg0: i32, %arg1: memref<128x2xi32, #tpu.memory_space<vmem>>, %arg2: memref<512x128xbf16, #tpu.memory_space<vmem>>, %arg3: memref<128x128xbf16, #tpu.memory_space<vmem>>, %arg4: memref<1x128xf32, #tpu.memory_space<vmem>>, %arg5: memref<128x256xbf16, #tpu.memory_space<vmem>>, %arg6: memref<1x256xf32, #tpu.memory_space<vmem>>, %arg7: memref<128x256xf32, #tpu.memory_space<vmem>>) attributes {dimension_semantics = [#tpu.dimension_semantics<parallel>], iteration_bounds = array<i64: 4>, scalar_prefetch = 0 : i64, scratch_operands = 0 : i64, tpu.core_type = #tpu.core_type<tc>, window_params = [{transform_indices = @transform_0, window_bounds = array<i64: 128, 2>}, {pipeline_mode = #tpu.pipeline_mode<synchronous>, transform_indices = @transform_1, window_bounds = array<i64: 512, 128>}, {pipeline_mode = #tpu.pipeline_mode<synchronous>, transform_indices = @transform_2, window_bounds = array<i64: 128, 128>}, {pipeline_mode = #tpu.pipeline_mode<synchronous>, transform_indices = @transform_3, window_bounds = array<i64: 1, 128>}, {pipeline_mode = #tpu.pipeline_mode<synchronous>, transform_indices = @transform_4, window_bounds = array<i64: 128, 256>}, {pipeline_mode = #tpu.pipeline_mode<synchronous>, transform_indices = @transform_5, window_bounds = array<i64: 1, 256>}, {transform_indices = @transform_6, window_bounds = array<i64: 128, 256>}]} {
    %c0 = arith.constant 0 : index
    %c0_0 = arith.constant 0 : index
    %0 = vector.load %arg1[%c0, %c0_0] : memref<128x2xi32, #tpu.memory_space<vmem>>, vector<128x2xi32>
    %1 = tpu.iota {dimensions = array<i32: 1>} : vector<128x512xi32>
    %2 = vector.extract_strided_slice %0 {offsets = [0, 0], sizes = [128, 1], strides = [1, 1]} : vector<128x2xi32> to vector<128x1xi32>
    %3 = vector.broadcast %2 : vector<128x1xi32> to vector<128x512xi32>
    %4 = arith.cmpi eq, %1, %3 : vector<128x512xi32>
    %5 = vector.extract_strided_slice %0 {offsets = [0, 1], sizes = [128, 1], strides = [1, 1]} : vector<128x2xi32> to vector<128x1xi32>
    %c256_i32 = arith.constant 256 : i32
    %6 = vector.broadcast %c256_i32 : i32 to vector<128x1xi32>
    %7 = arith.addi %5, %6 : vector<128x1xi32>
    %8 = vector.broadcast %7 : vector<128x1xi32> to vector<128x512xi32>
    %9 = arith.cmpi eq, %1, %8 : vector<128x512xi32>
    %10 = arith.ori %4, %9 : vector<128x512xi1>
    %11 = arith.extui %10 : vector<128x512xi1> to vector<128x512xi32>
    %12 = arith.sitofp %11 : vector<128x512xi32> to vector<128x512xf32>
    %13 = arith.truncf %12 : vector<128x512xf32> to vector<128x512xbf16>
    %c0_1 = arith.constant 0 : index
    %c0_2 = arith.constant 0 : index
    %14 = vector.load %arg2[%c0_1, %c0_2] : memref<512x128xbf16, #tpu.memory_space<vmem>>, vector<512x128xbf16>
    %cst = arith.constant dense<0.000000e+00> : vector<128x128xf32>
    %15 = tpu.matmul %13, %14, %cst {dimension_numbers = #tpu.dot_dimension_numbers<[1], [0], [0], [1], [0, 0, 1, 1], [], []>} : vector<128x512xbf16>, vector<512x128xbf16>, vector<128x128xf32> -> vector<128x128xf32>
    %16 = arith.truncf %15 : vector<128x128xf32> to vector<128x128xbf16>
    %c0_3 = arith.constant 0 : index
    %c0_4 = arith.constant 0 : index
    %17 = vector.load %arg3[%c0_3, %c0_4] : memref<128x128xbf16, #tpu.memory_space<vmem>>, vector<128x128xbf16>
    %cst_5 = arith.constant dense<0.000000e+00> : vector<128x128xf32>
    %18 = tpu.matmul %16, %17, %cst_5 {dimension_numbers = #tpu.dot_dimension_numbers<[1], [0], [0], [1], [0, 0, 1, 1], [], []>} : vector<128x128xbf16>, vector<128x128xbf16>, vector<128x128xf32> -> vector<128x128xf32>
    %c0_6 = arith.constant 0 : index
    %c0_7 = arith.constant 0 : index
    %19 = vector.load %arg4[%c0_6, %c0_7] : memref<1x128xf32, #tpu.memory_space<vmem>>, vector<1x128xf32>
    %20 = vector.broadcast %19 : vector<1x128xf32> to vector<128x128xf32>
    %21 = arith.addf %18, %20 : vector<128x128xf32>
    %cst_8 = arith.constant 0.000000e+00 : f32
    %22 = vector.broadcast %cst_8 : f32 to vector<128x128xf32>
    %23 = arith.maximumf %21, %22 : vector<128x128xf32>
    %24 = arith.truncf %23 : vector<128x128xf32> to vector<128x128xbf16>
    %c0_9 = arith.constant 0 : index
    %c0_10 = arith.constant 0 : index
    %25 = vector.load %arg5[%c0_9, %c0_10] : memref<128x256xbf16, #tpu.memory_space<vmem>>, vector<128x256xbf16>
    %cst_11 = arith.constant dense<0.000000e+00> : vector<128x256xf32>
    %26 = tpu.matmul %24, %25, %cst_11 {dimension_numbers = #tpu.dot_dimension_numbers<[1], [0], [0], [1], [0, 0, 1, 1], [], []>} : vector<128x128xbf16>, vector<128x256xbf16>, vector<128x256xf32> -> vector<128x256xf32>
    %c0_12 = arith.constant 0 : index
    %c0_13 = arith.constant 0 : index
    %27 = vector.load %arg6[%c0_12, %c0_13] : memref<1x256xf32, #tpu.memory_space<vmem>>, vector<1x256xf32>
    %28 = vector.broadcast %27 : vector<1x256xf32> to vector<128x256xf32>
    %29 = arith.addf %26, %28 : vector<128x256xf32>
    %cst_14 = arith.constant dense<0xFF800000> : vector<128xf32>
    %30 = vector.multi_reduction <maximumf>, %29, %cst_14 [1] : vector<128x256xf32> to vector<128xf32>
    %31 = vector.shape_cast %30 : vector<128xf32> to vector<128x1xf32>
    %32 = vector.broadcast %31 : vector<128x1xf32> to vector<128x256xf32>
    %33 = arith.subf %29, %32 : vector<128x256xf32>
    %34 = math.exp %33 : vector<128x256xf32>
    %cst_15 = arith.constant dense<0.000000e+00> : vector<128xf32>
    %35 = vector.multi_reduction <add>, %34, %cst_15 [1] : vector<128x256xf32> to vector<128xf32>
    %36 = vector.shape_cast %35 : vector<128xf32> to vector<128x1xf32>
    %37 = math.log %36 : vector<128x1xf32>
    %38 = arith.addf %31, %37 : vector<128x1xf32>
    %39 = vector.broadcast %38 : vector<128x1xf32> to vector<128x256xf32>
    %40 = arith.subf %29, %39 : vector<128x256xf32>
    %c0_16 = arith.constant 0 : index
    %c0_17 = arith.constant 0 : index
    %41 = vector.load %arg7[%c0_16, %c0_17] : memref<128x256xf32, #tpu.memory_space<vmem>>, vector<128x256xf32>
    tpu.vector_store %arg7[%c0_16, %c0_17], %40 {strides = array<i32>} : memref<128x256xf32, #tpu.memory_space<vmem>>, vector<128x256xf32>,
    return
  }
  func.func @transform_0(%arg0: i32) -> (i32, i32) {
    %c0_i32 = arith.constant 0 : i32
    %c0_i32_0 = arith.constant 0 : i32
    return %arg0, %c0_i32 : i32, i32
  }
  func.func @transform_1(%arg0: i32) -> (i32, i32) {
    %c0_i32 = arith.constant 0 : i32
    %c0_i32_0 = arith.constant 0 : i32
    %c0_i32_1 = arith.constant 0 : i32
    return %c0_i32, %c0_i32_0 : i32, i32
  }
  func.func @transform_2(%arg0: i32) -> (i32, i32) {
    %c0_i32 = arith.constant 0 : i32
    %c0_i32_0 = arith.constant 0 : i32
    %c0_i32_1 = arith.constant 0 : i32
    return %c0_i32, %c0_i32_0 : i32, i32
  }
  func.func @transform_3(%arg0: i32) -> (i32, i32) {
    %c0_i32 = arith.constant 0 : i32
    %c0_i32_0 = arith.constant 0 : i32
    %c0_i32_1 = arith.constant 0 : i32
    return %c0_i32, %c0_i32_0 : i32, i32
  }
  func.func @transform_4(%arg0: i32) -> (i32, i32) {
    %c0_i32 = arith.constant 0 : i32
    %c0_i32_0 = arith.constant 0 : i32
    %c0_i32_1 = arith.constant 0 : i32
    return %c0_i32, %c0_i32_0 : i32, i32
  }
  func.func @transform_5(%arg0: i32) -> (i32, i32) {
    %c0_i32 = arith.constant 0 : i32
    %c0_i32_0 = arith.constant 0 : i32
    %c0_i32_1 = arith.constant 0 : i32
    return %c0_i32, %c0_i32_0 : i32, i32
  }
  func.func @transform_6(%arg0: i32) -> (i32, i32) {
    %c0_i32 = arith.constant 0 : i32
    %c0_i32_0 = arith.constant 0 : i32
    return %arg0, %c0_i32 : i32, i32
  }
}

</mosaic_0001>

<llo_original>
// kernel: tpu_custom_call.1
$region0: #{tpu_custom_call.1}
  #allocation0 [shape = 'u32[]', space=smem, size = 0x4, offset = 0x4, fixed_abs, tag = 'smem constant byte address 0x4 - core index']
  #allocation1 [shape = 'u32[72,128]{1,0:T(1,128)}', space=vmem, size = 0x9000, scoped, tag = 'internal scratch']
  %s0 = inlined_call_operand.vmem [shape: s32[512,2], index: 0, kind: input, shape index: {}]
  %s1 = inlined_call_operand.vmem [shape: bf16[512,128], index: 1, kind: input, shape index: {}]
  %s2 = inlined_call_operand.vmem [shape: bf16[128,128], index: 2, kind: input, shape index: {}]
  %s3 = inlined_call_operand.vmem [shape: f32[1,128], index: 3, kind: input, shape index: {}]
  %s4 = inlined_call_operand.vmem [shape: bf16[128,256], index: 4, kind: input, shape index: {}]
  %s5 = inlined_call_operand.vmem [shape: f32[1,256], index: 5, kind: input, shape index: {}]
  %s6 = inlined_call_operand.hbm [shape: f32[512,256], index: 6, kind: output, shape index: {}]
  %s7 = sld [smem:[#allocation0]]
  $region57: #{tpu_custom_call.1} parent=0
    _
  %s9 = ssub.s32 1, %s7
  %s10 = scalar_select 0, %s9, %s7
  $region1: #{tpu_custom_call.1} parent=0
    #allocation2 [shape = 'u8[262144]{0}', space=vmem, size = 0x40000, scoped, tag = 'output window, operand 0']
    #allocation3 [shape = 's32[2]{0}', space=sflag, size = 0x8, scoped, tag = 'scoped memory for tpu_custom_call.1']
    %11 = vsyncpa [#allocation3], 0
    %s12 = scalar_lea.sflag [#allocation3], 1
    %13 = vsyncpa %s12, 0
    loop: start=0, step=1, limit=6
    $region2: #{tpu_custom_call.1} parent=1 // loop_pre_header
      _
    $region3: #{tpu_custom_call.1} parent=1 // loop_header
      %s15 = sphi 0, %s19
      %p16 = scmp.ge.s32.totalorder %s15, 6
      %s25 = sphi 0, %s27
      %s28 = sphi 0, %s25
      %s29 = sphi 0, %s28
      %s45 = sphi 0, %s29
      %s49 = sphi 0, %s49
      %s51 = sphi 0, %s49
      %s52 = sphi 0, %s51
      %s66 = sphi 0, %s52
      %s70 = sphi 0, %s70
      %s72 = sphi 0, %s70
      %s73 = sphi 0, %s72
      %s87 = sphi 0, %s73
      %s91 = sphi 0, %s91
      %s93 = sphi 0, %s91
      %s94 = sphi 0, %s93
      %s108 = sphi 0, %s94
      %s112 = sphi 0, %s112
      %s114 = sphi 0, %s112
      %s115 = sphi 0, %s114
      %s129 = sphi 0, %s115
      %s133 = sphi 0, %s133
      %s135 = sphi 0, %s133
      %s136 = sphi 0, %s135
      %s150 = sphi 0, %s136
      %s156 = sphi 0, %s158
      %s159 = sphi 0, %s156
      %s160 = sphi 0, %s159
      %s176 = sphi 0, %s160
    $region4: #{tpu_custom_call.1} parent=1 // loop_header_branch
      %18 = sbr.rel (%p16) target = $region8
    $region5: #{tpu_custom_call.1} parent=1 // loop_body
      %s20 = ssub.s32 %s15, 1
      %s21 = ssub.s32 %s15, 2
      %s22 = sadd.s32 %s15, 1
      %s23 = ssub.s32 %s15, %s22
      %p24 = scmp.eq.s32.totalorder %s23, 0
      %s26 = sadd.s32 %s25, 1
      %s27 = scalar_select %p24, %s25, %s26
      %p30 = pneg %p24
      %p31 = scmp.eq.s32.totalorder %s15, 3
      %p32 = por %p30, %p31
      %p33 = scmp.ne.s32.totalorder %s25, %s28
      %p34 = scmp.eq.s32.totalorder %s15, 0
      %p35 = por %p33, %p34
      %p36 = scmp.ne.s32.totalorder %s25, %s28
      %p37 = scmp.eq.s32.totalorder %s20, 3
      %p38 = por %p36, %p37
      %p39 = scmp.ne.s32.totalorder %s28, %s29
      %p40 = scmp.eq.s32.totalorder %s20, 0
      %p41 = por %p39, %p40
      %p42 = scmp.ne.s32.totalorder %s28, %s29
      %p43 = scmp.eq.s32.totalorder %s21, 3
      %p44 = por %p42, %p43
      %p46 = scmp.ne.s32.totalorder %s29, %s45
      %p47 = scmp.eq.s32.totalorder %s21, 0
      %p48 = por %p46, %p47
      %s50 = sadd.s32 %s49, 1
      %p53 = scmp.eq.s32.totalorder %s15, 3
      %p54 = scmp.ne.s32.totalorder %s49, %s51
      %p55 = scmp.eq.s32.totalorder %s15, 0
      %p56 = por %p54, %p55
      %p57 = scmp.ne.s32.totalorder %s49, %s51
      %p58 = scmp.eq.s32.totalorder %s20, 3
      %p59 = por %p57, %p58
      %p60 = scmp.ne.s32.totalorder %s51, %s52
      %p61 = scmp.eq.s32.totalorder %s20, 0
      %p62 = por %p60, %p61
      %p63 = scmp.ne.s32.totalorder %s51, %s52
      %p64 = scmp.eq.s32.totalorder %s21, 3
      %p65 = por %p63, %p64
      %p67 = scmp.ne.s32.totalorder %s52, %s66
      %p68 = scmp.eq.s32.totalorder %s21, 0
      %p69 = por %p67, %p68
      %s71 = sadd.s32 %s70, 1
      %p74 = scmp.eq.s32.totalorder %s15, 3
      %p75 = scmp.ne.s32.totalorder %s70, %s72
      %p76 = scmp.eq.s32.totalorder %s15, 0
      %p77 = por %p75, %p76
      %p78 = scmp.ne.s32.totalorder %s70, %s72
      %p79 = scmp.eq.s32.totalorder %s20, 3
      %p80 = por %p78, %p79
      %p81 = scmp.ne.s32.totalorder %s72, %s73
      %p82 = scmp.eq.s32.totalorder %s20, 0
      %p83 = por %p81, %p82
      %p84 = scmp.ne.s32.totalorder %s72, %s73
      %p85 = scmp.eq.s32.totalorder %s21, 3
      %p86 = por %p84, %p85
      %p88 = scmp.ne.s32.totalorder %s73, %s87
      %p89 = scmp.eq.s32.totalorder %s21, 0
      %p90 = por %p88, %p89
      %s92 = sadd.s32 %s91, 1
      %p95 = scmp.eq.s32.totalorder %s15, 3
      %p96 = scmp.ne.s32.totalorder %s91, %s93
      %p97 = scmp.eq.s32.totalorder %s15, 0
      %p98 = por %p96, %p97
      %p99 = scmp.ne.s32.totalorder %s91, %s93
      %p100 = scmp.eq.s32.totalorder %s20, 3
      %p101 = por %p99, %p100
      %p102 = scmp.ne.s32.totalorder %s93, %s94
      %p103 = scmp.eq.s32.totalorder %s20, 0
      %p104 = por %p102, %p103
      %p105 = scmp.ne.s32.totalorder %s93, %s94
      %p106 = scmp.eq.s32.totalorder %s21, 3
      %p107 = por %p105, %p106
      %p109 = scmp.ne.s32.totalorder %s94, %s108
      %p110 = scmp.eq.s32.totalorder %s21, 0
      %p111 = por %p109, %p110
      %s113 = sadd.s32 %s112, 1
      %p116 = scmp.eq.s32.totalorder %s15, 3
      %p117 = scmp.ne.s32.totalorder %s112, %s114
      %p118 = scmp.eq.s32.totalorder %s15, 0
      %p119 = por %p117, %p118
      %p120 = scmp.ne.s32.totalorder %s112, %s114
      %p121 = scmp.eq.s32.totalorder %s20, 3
      %p122 = por %p120, %p121
      %p123 = scmp.ne.s32.totalorder %s114, %s115
      %p124 = scmp.eq.s32.totalorder %s20, 0
      %p125 = por %p123, %p124
      %p126 = scmp.ne.s32.totalorder %s114, %s115
      %p127 = scmp.eq.s32.totalorder %s21, 3
      %p128 = por %p126, %p127
      %p130 = scmp.ne.s32.totalorder %s115, %s129
      %p131 = scmp.eq.s32.totalorder %s21, 0
      %p132 = por %p130, %p131
      %s134 = sadd.s32 %s133, 1
      %p137 = scmp.eq.s32.totalorder %s15, 3
      %p138 = scmp.ne.s32.totalorder %s133, %s135
      %p139 = scmp.eq.s32.totalorder %s15, 0
      %p140 = por %p138, %p139
      %p141 = scmp.ne.s32.totalorder %s133, %s135
      %p142 = scmp.eq.s32.totalorder %s20, 3
      %p143 = por %p141, %p142
      %p144 = scmp.ne.s32.totalorder %s135, %s136
      %p145 = scmp.eq.s32.totalorder %s20, 0
      %p146 = por %p144, %p145
      %p147 = scmp.ne.s32.totalorder %s135, %s136
      %p148 = scmp.eq.s32.totalorder %s21, 3
      %p149 = por %p147, %p148
      %p151 = scmp.ne.s32.totalorder %s136, %s150
      %p152 = scmp.eq.s32.totalorder %s21, 0
      %p153 = por %p151, %p152
      %s154 = ssub.s32 %s15, %s22
      %p155 = scmp.eq.s32.totalorder %s154, 0
      %s157 = sadd.s32 %s156, 1
      %s158 = scalar_select %p155, %s156, %s157
      %p161 = pneg %p155
      %p162 = scmp.eq.s32.totalorder %s15, 3
      %p163 = por %p161, %p162
      %p164 = scmp.ne.s32.totalorder %s156, %s159
      %p165 = scmp.eq.s32.totalorder %s15, 0
      %p166 = por %p164, %p165
      %p167 = scmp.ne.s32.totalorder %s156, %s159
      %p168 = scmp.eq.s32.totalorder %s20, 3
      %p169 = por %p167, %p168
      %p170 = scmp.ne.s32.totalorder %s159, %s160
      %p171 = scmp.eq.s32.totalorder %s20, 0
      %p172 = por %p170, %p171
      %p173 = scmp.ne.s32.totalorder %s159, %s160
      %p174 = scmp.eq.s32.totalorder %s21, 3
      %p175 = por %p173, %p174
      %p177 = scmp.ne.s32.totalorder %s160, %s176
      %p178 = scmp.eq.s32.totalorder %s21, 0
      %p179 = por %p177, %p178
      %p180 = scmp.le.s32.totalorder 1, %s15
      %p181 = scmp.lt.s32.totalorder %s15, 5
      %p182 = pnand %p180, %p181
      %p183 = pneg %p182
      // Predicated region
      $region9: #{tpu_custom_call.1} parent=5 // pred_check
        _
      $region10: #{tpu_custom_call.1} parent=5 // pred_check_branch
        %185 = sbr.rel (%p182) target = $region12
      $region11: #{tpu_custom_call.1} parent=5 // pred_region
        %s186 = ssub.s32 %s15, 1
        // Predicated region
        $region13: #{tpu_custom_call.1} parent=11 // pred_check
          %p187 = pneg %p62
        $region14: #{tpu_custom_call.1} parent=11 // pred_check_branch
          %189 = sbr.rel (%p187) target = $region16
        $region15: #{tpu_custom_call.1} parent=11 // pred_region
          _
        $region16: #{tpu_custom_call.1} parent=11 // pred_fallthru
          _
        // Predicated region
        $region17: #{tpu_custom_call.1} parent=11 // pred_check
          %p190 = pneg %p83
        $region18: #{tpu_custom_call.1} parent=11 // pred_check_branch
          %192 = sbr.rel (%p190) target = $region20
        $region19: #{tpu_custom_call.1} parent=11 // pred_region
          _
        $region20: #{tpu_custom_call.1} parent=11 // pred_fallthru
          _
        // Predicated region
        $region21: #{tpu_custom_call.1} parent=11 // pred_check
          %p193 = pneg %p104
        $region22: #{tpu_custom_call.1} parent=11 // pred_check_branch
          %195 = sbr.rel (%p193) target = $region24
        $region23: #{tpu_custom_call.1} parent=11 // pred_region
          _
        $region24: #{tpu_custom_call.1} parent=11 // pred_fallthru
          _
        // Predicated region
        $region25: #{tpu_custom_call.1} parent=11 // pred_check
          %p196 = pneg %p125
        $region26: #{tpu_custom_call.1} parent=11 // pred_check_branch
          %198 = sbr.rel (%p196) target = $region28
        $region27: #{tpu_custom_call.1} parent=11 // pred_region
          _
        $region28: #{tpu_custom_call.1} parent=11 // pred_fallthru
          _
        // Predicated region
        $region29: #{tpu_custom_call.1} parent=11 // pred_check
          %p199 = pneg %p146
        $region30: #{tpu_custom_call.1} parent=11 // pred_check_branch
          %201 = sbr.rel (%p199) target = $region32
        $region31: #{tpu_custom_call.1} parent=11 // pred_region
          _
        $region32: #{tpu_custom_call.1} parent=11 // pred_fallthru
          _
      $region12: #{tpu_custom_call.1} parent=5 // pred_fallthru
        _
      %p202 = scmp.lt.s32.totalorder %s15, 4
      // Predicated region
      $region33: #{tpu_custom_call.1} parent=5 // pred_check
        %p203 = pneg %p202
      $region34: #{tpu_custom_call.1} parent=5 // pred_check_branch
        %205 = sbr.rel (%p203) target = $region36
      $region35: #{tpu_custom_call.1} parent=5 // pred_region
        // Predicated region
        $region37: #{tpu_custom_call.1} parent=35 // pred_check
          %p206 = pneg %p35
        $region38: #{tpu_custom_call.1} parent=35 // pred_check_branch
          %208 = sbr.rel (%p206) target = $region40
        $region39: #{tpu_custom_call.1} parent=35 // pred_region
          %s209 = smul.u32 16, %s15
          %p210 = scmp.lt.s32.totalorder %s209, 63
          %s211 = scalar_select %p210, %s209, 63
          %s212 = smul.addr %s211, 8
          %s213 = scalar_lea.vmem %s0, %s212
          %s214 = smul.u32 16, %s15
        $region40: #{tpu_custom_call.1} parent=35 // pred_fallthru
          _
      $region36: #{tpu_custom_call.1} parent=5 // pred_fallthru
        _
      %p215 = scmp.le.s32.totalorder 1, %s15
      %p216 = scmp.lt.s32.totalorder %s15, 5
      %p217 = pnand %p215, %p216
      %p218 = pneg %p217
      // Predicated region
      $region41: #{tpu_custom_call.1} parent=5 // pred_check
        _
      $region42: #{tpu_custom_call.1} parent=5 // pred_check_branch
        %220 = sbr.rel (%p217) target = $region44
      $region43: #{tpu_custom_call.1} parent=5 // pred_region
        %s221 = ssub.s32 %s15, 1
        %s222 = smul.u32 16, %s20
        %p223 = scmp.lt.s32.totalorder %s222, 63
        %s224 = scalar_select %p223, %s222, 63
        %s225 = smul.addr %s224, 8
        %s226 = scalar_lea.vmem %s0, %s225
        %p227 = pneg %p41
        %p228 = pneg %p38
        %p229 = pneg %p62
        %p230 = pneg %p59
        %p231 = pneg %p83
        %p232 = pneg %p80
        %p233 = pneg %p104
        %p234 = pneg %p101
        %p235 = pneg %p125
        %p236 = pneg %p122
        %p237 = pneg %p146
        %p238 = pneg %p143
        %p239 = pneg %p172
        %p240 = pneg %p169
        %s241 = sand.u32 %s159, 1
        %s242 = scalar_lea.sflag [#allocation3], %s241
        %s243 = sand.u32 %s159, 1
        %s244 = smul.addr %s243, 256
        %s245 = scalar_lea.vmem [#allocation2], %s244
        %s246 = smul.u32 16, %s20
        %p247 = scmp.lt.s32.totalorder %s246, 63
        %s248 = scalar_select %p247, %s246, 63
        %s249 = smul.addr %s248, 8
        %s250 = scalar_lea.vmem %s0, %s249
        %s251 = smul.u32 16, %s20
        %s252 = smul.u32 16, %s20
        %v253 = vld [vmem:[%s250] sm:$0xff]
        %v254 = vld [vmem:[%s250 + $0x8] sm:$0xff]
        %v255 = vld [vmem:[%s250 + $0x10] sm:$0xff]
        %v256 = vld [vmem:[%s250 + $0x18] sm:$0xff]
        %v257 = vld [vmem:[%s250 + $0x20] sm:$0xff]
        %v258 = vld [vmem:[%s250 + $0x28] sm:$0xff]
        %v259 = vld [vmem:[%s250 + $0x30] sm:$0xff]
        %v260 = vld [vmem:[%s250 + $0x38] sm:$0xff]
        %v261 = vld [vmem:[%s250 + $0x40] sm:$0xff]
        %v262 = vld [vmem:[%s250 + $0x48] sm:$0xff]
        %v263 = vld [vmem:[%s250 + $0x50] sm:$0xff]
        %v264 = vld [vmem:[%s250 + $0x58] sm:$0xff]
        %v265 = vld [vmem:[%s250 + $0x60] sm:$0xff]
        %v266 = vld [vmem:[%s250 + $0x68] sm:$0xff]
        %v267 = vld [vmem:[%s250 + $0x70] sm:$0xff]
        %v268 = vld [vmem:[%s250 + $0x78] sm:$0xff]
        %v269 = vlaneseq
        %v270 = vand.u32 %v269, 127
        %v271 = vadd.s32 %v270, 128
        %v272 = vadd.s32 %v270, 256
        %v273 = vadd.s32 %v270, 384
        %274 = vset.pattern.permute.xlu0 0
        %275 = vperm.xlu0 %274, %v253
        %v276 = vpop.permute.xlu0 %275
        %277 = vset.pattern.permute.xlu0 0
        %278 = vperm.xlu0 %277, %v254
        %v279 = vpop.permute.xlu0 %278
        %280 = vset.pattern.permute.xlu0 0
        %281 = vperm.xlu0 %280, %v255
        %v282 = vpop.permute.xlu0 %281
        %283 = vset.pattern.permute.xlu0 0
        %284 = vperm.xlu0 %283, %v256
        %v285 = vpop.permute.xlu0 %284
        %286 = vset.pattern.permute.xlu0 0
        %287 = vperm.xlu0 %286, %v257
        %v288 = vpop.permute.xlu0 %287
        %289 = vset.pattern.permute.xlu0 0
        %290 = vperm.xlu0 %289, %v258
        %v291 = vpop.permute.xlu0 %290
        %292 = vset.pattern.permute.xlu0 0
        %293 = vperm.xlu0 %292, %v259
        %v294 = vpop.permute.xlu0 %293
        %295 = vset.pattern.permute.xlu0 0
        %296 = vperm.xlu0 %295, %v260
        %v297 = vpop.permute.xlu0 %296
        %298 = vset.pattern.permute.xlu0 0
        %299 = vperm.xlu0 %298, %v261
        %v300 = vpop.permute.xlu0 %299
        %301 = vset.pattern.permute.xlu0 0
        %302 = vperm.xlu0 %301, %v262
        %v303 = vpop.permute.xlu0 %302
        %304 = vset.pattern.permute.xlu0 0
        %305 = vperm.xlu0 %304, %v263
        %v306 = vpop.permute.xlu0 %305
        %307 = vset.pattern.permute.xlu0 0
        %308 = vperm.xlu0 %307, %v264
        %v309 = vpop.permute.xlu0 %308
        %310 = vset.pattern.permute.xlu0 0
        %311 = vperm.xlu0 %310, %v265
        %v312 = vpop.permute.xlu0 %311
        %313 = vset.pattern.permute.xlu0 0
        %314 = vperm.xlu0 %313, %v266
        %v315 = vpop.permute.xlu0 %314
        %316 = vset.pattern.permute.xlu0 0
        %317 = vperm.xlu0 %316, %v267
        %v318 = vpop.permute.xlu0 %317
        %319 = vset.pattern.permute.xlu0 0
        %320 = vperm.xlu0 %319, %v268
        %v321 = vpop.permute.xlu0 %320
        %vm322 = vcmp.eq.s32.totalorder %v270, %v276
        %vm323 = vcmp.eq.s32.totalorder %v271, %v276
        %vm324 = vcmp.eq.s32.totalorder %v272, %v276
        %vm325 = vcmp.eq.s32.totalorder %v273, %v276
        %vm326 = vcmp.eq.s32.totalorder %v270, %v279
        %vm327 = vcmp.eq.s32.totalorder %v271, %v279
        %vm328 = vcmp.eq.s32.totalorder %v272, %v279
        %vm329 = vcmp.eq.s32.totalorder %v273, %v279
        %vm330 = vcmp.eq.s32.totalorder %v270, %v282
        %vm331 = vcmp.eq.s32.totalorder %v271, %v282
        %vm332 = vcmp.eq.s32.totalorder %v272, %v282
        %vm333 = vcmp.eq.s32.totalorder %v273, %v282
        %vm334 = vcmp.eq.s32.totalorder %v270, %v285
        %vm335 = vcmp.eq.s32.totalorder %v271, %v285
        %vm336 = vcmp.eq.s32.totalorder %v272, %v285
        %vm337 = vcmp.eq.s32.totalorder %v273, %v285
        %vm338 = vcmp.eq.s32.totalorder %v270, %v288
        %vm339 = vcmp.eq.s32.totalorder %v271, %v288
        %vm340 = vcmp.eq.s32.totalorder %v272, %v288
        %vm341 = vcmp.eq.s32.totalorder %v273, %v288
        %vm342 = vcmp.eq.s32.totalorder %v270, %v291
        %vm343 = vcmp.eq.s32.totalorder %v271, %v291
        %vm344 = vcmp.eq.s32.totalorder %v272, %v291
        %vm345 = vcmp.eq.s32.totalorder %v273, %v291
        %vm346 = vcmp.eq.s32.totalorder %v270, %v294
        %vm347 = vcmp.eq.s32.totalorder %v271, %v294
        %vm348 = vcmp.eq.s32.totalorder %v272, %v294
        %vm349 = vcmp.eq.s32.totalorder %v273, %v294
        %vm350 = vcmp.eq.s32.totalorder %v270, %v297
        %vm351 = vcmp.eq.s32.totalorder %v271, %v297
        %vm352 = vcmp.eq.s32.totalorder %v272, %v297
        %vm353 = vcmp.eq.s32.totalorder %v273, %v297
        %vm354 = vcmp.eq.s32.totalorder %v270, %v300
        %vm355 = vcmp.eq.s32.totalorder %v271, %v300
        %vm356 = vcmp.eq.s32.totalorder %v272, %v300
        %vm357 = vcmp.eq.s32.totalorder %v273, %v300
        %vm358 = vcmp.eq.s32.totalorder %v270, %v303
        %vm359 = vcmp.eq.s32.totalorder %v271, %v303
        %vm360 = vcmp.eq.s32.totalorder %v272, %v303
        %vm361 = vcmp.eq.s32.totalorder %v273, %v303
        %vm362 = vcmp.eq.s32.totalorder %v270, %v306
        %vm363 = vcmp.eq.s32.totalorder %v271, %v306
        %vm364 = vcmp.eq.s32.totalorder %v272, %v306
        %vm365 = vcmp.eq.s32.totalorder %v273, %v306
        %vm366 = vcmp.eq.s32.totalorder %v270, %v309
        %vm367 = vcmp.eq.s32.totalorder %v271, %v309
        %vm368 = vcmp.eq.s32.totalorder %v272, %v309
        %vm369 = vcmp.eq.s32.totalorder %v273, %v309
        %vm370 = vcmp.eq.s32.totalorder %v270, %v312
        %vm371 = vcmp.eq.s32.totalorder %v271, %v312
        %vm372 = vcmp.eq.s32.totalorder %v272, %v312
        %vm373 = vcmp.eq.s32.totalorder %v273, %v312
        %vm374 = vcmp.eq.s32.totalorder %v270, %v315
        %vm375 = vcmp.eq.s32.totalorder %v271, %v315
        %vm376 = vcmp.eq.s32.totalorder %v272, %v315
        %vm377 = vcmp.eq.s32.totalorder %v273, %v315
        %vm378 = vcmp.eq.s32.totalorder %v270, %v318
        %vm379 = vcmp.eq.s32.totalorder %v271, %v318
        %vm380 = vcmp.eq.s32.totalorder %v272, %v318
        %vm381 = vcmp.eq.s32.totalorder %v273, %v318
        %vm382 = vcmp.eq.s32.totalorder %v270, %v321
        %vm383 = vcmp.eq.s32.totalorder %v271, %v321
        %vm384 = vcmp.eq.s32.totalorder %v272, %v321
        %vm385 = vcmp.eq.s32.totalorder %v273, %v321
        %v386 = vadd.s32 %v253, 256
        %v387 = vadd.s32 %v254, 256
        %v388 = vadd.s32 %v255, 256
        %v389 = vadd.s32 %v256, 256
        %v390 = vadd.s32 %v257, 256
        %v391 = vadd.s32 %v258, 256
        %v392 = vadd.s32 %v259, 256
        %v393 = vadd.s32 %v260, 256
        %v394 = vadd.s32 %v261, 256
        %v395 = vadd.s32 %v262, 256
        %v396 = vadd.s32 %v263, 256
        %v397 = vadd.s32 %v264, 256
        %v398 = vadd.s32 %v265, 256
        %v399 = vadd.s32 %v266, 256
        %v400 = vadd.s32 %v267, 256
        %v401 = vadd.s32 %v268, 256
        %402 = vset.pattern.permute.xlu0 1
        %403 = vperm.xlu0 %402, %v386
        %v404 = vpop.permute.xlu0 %403
        %405 = vset.pattern.permute.xlu0 1
        %406 = vperm.xlu0 %405, %v387
        %v407 = vpop.permute.xlu0 %406
        %408 = vset.pattern.permute.xlu0 1
        %409 = vperm.xlu0 %408, %v388
        %v410 = vpop.permute.xlu0 %409
        %411 = vset.pattern.permute.xlu0 1
        %412 = vperm.xlu0 %411, %v389
        %v413 = vpop.permute.xlu0 %412
        %414 = vset.pattern.permute.xlu0 1
        %415 = vperm.xlu0 %414, %v390
        %v416 = vpop.permute.xlu0 %415
        %417 = vset.pattern.permute.xlu0 1
        %418 = vperm.xlu0 %417, %v391
        %v419 = vpop.permute.xlu0 %418
        %420 = vset.pattern.permute.xlu0 1
        %421 = vperm.xlu0 %420, %v392
        %v422 = vpop.permute.xlu0 %421
        %423 = vset.pattern.permute.xlu0 1
        %424 = vperm.xlu0 %423, %v393
        %v425 = vpop.permute.xlu0 %424
        %426 = vset.pattern.permute.xlu0 1
        %427 = vperm.xlu0 %426, %v394
        %v428 = vpop.permute.xlu0 %427
        %429 = vset.pattern.permute.xlu0 1
        %430 = vperm.xlu0 %429, %v395
        %v431 = vpop.permute.xlu0 %430
        %432 = vset.pattern.permute.xlu0 1
        %433 = vperm.xlu0 %432, %v396
        %v434 = vpop.permute.xlu0 %433
        %435 = vset.pattern.permute.xlu0 1
        %436 = vperm.xlu0 %435, %v397
        %v437 = vpop.permute.xlu0 %436
        %438 = vset.pattern.permute.xlu0 1
        %439 = vperm.xlu0 %438, %v398
        %v440 = vpop.permute.xlu0 %439
        %441 = vset.pattern.permute.xlu0 1
        %442 = vperm.xlu0 %441, %v399
        %v443 = vpop.permute.xlu0 %442
        %444 = vset.pattern.permute.xlu0 1
        %445 = vperm.xlu0 %444, %v400
        %v446 = vpop.permute.xlu0 %445
        %447 = vset.pattern.permute.xlu0 1
        %448 = vperm.xlu0 %447, %v401
        %v449 = vpop.permute.xlu0 %448
        %vm450 = vcmp.eq.s32.totalorder %v270, %v404
        %vm451 = vcmp.eq.s32.totalorder %v271, %v404
        %vm452 = vcmp.eq.s32.totalorder %v272, %v404
        %vm453 = vcmp.eq.s32.totalorder %v273, %v404
        %vm454 = vcmp.eq.s32.totalorder %v270, %v407
        %vm455 = vcmp.eq.s32.totalorder %v271, %v407
        %vm456 = vcmp.eq.s32.totalorder %v272, %v407
        %vm457 = vcmp.eq.s32.totalorder %v273, %v407
        %vm458 = vcmp.eq.s32.totalorder %v270, %v410
        %vm459 = vcmp.eq.s32.totalorder %v271, %v410
        %vm460 = vcmp.eq.s32.totalorder %v272, %v410
        %vm461 = vcmp.eq.s32.totalorder %v273, %v410
        %vm462 = vcmp.eq.s32.totalorder %v270, %v413
        %vm463 = vcmp.eq.s32.totalorder %v271, %v413
        %vm464 = vcmp.eq.s32.totalorder %v272, %v413
        %vm465 = vcmp.eq.s32.totalorder %v273, %v413
        %vm466 = vcmp.eq.s32.totalorder %v270, %v416
        %vm467 = vcmp.eq.s32.totalorder %v271, %v416
        %vm468 = vcmp.eq.s32.totalorder %v272, %v416
        %vm469 = vcmp.eq.s32.totalorder %v273, %v416
        %vm470 = vcmp.eq.s32.totalorder %v270, %v419
        %vm471 = vcmp.eq.s32.totalorder %v271, %v419
        %vm472 = vcmp.eq.s32.totalorder %v272, %v419
        %vm473 = vcmp.eq.s32.totalorder %v273, %v419
        %vm474 = vcmp.eq.s32.totalorder %v270, %v422
        %vm475 = vcmp.eq.s32.totalorder %v271, %v422
        %vm476 = vcmp.eq.s32.totalorder %v272, %v422
        %vm477 = vcmp.eq.s32.totalorder %v273, %v422
        %vm478 = vcmp.eq.s32.totalorder %v270, %v425
        %vm479 = vcmp.eq.s32.totalorder %v271, %v425
        %vm480 = vcmp.eq.s32.totalorder %v272, %v425
        %vm481 = vcmp.eq.s32.totalorder %v273, %v425
        %vm482 = vcmp.eq.s32.totalorder %v270, %v428
        %vm483 = vcmp.eq.s32.totalorder %v271, %v428
        %vm484 = vcmp.eq.s32.totalorder %v272, %v428
        %vm485 = vcmp.eq.s32.totalorder %v273, %v428
        %vm486 = vcmp.eq.s32.totalorder %v270, %v431
        %vm487 = vcmp.eq.s32.totalorder %v271, %v431
        %vm488 = vcmp.eq.s32.totalorder %v272, %v431
        %vm489 = vcmp.eq.s32.totalorder %v273, %v431
        %vm490 = vcmp.eq.s32.totalorder %v270, %v434
        %vm491 = vcmp.eq.s32.totalorder %v271, %v434
        %vm492 = vcmp.eq.s32.totalorder %v272, %v434
        %vm493 = vcmp.eq.s32.totalorder %v273, %v434
        %vm494 = vcmp.eq.s32.totalorder %v270, %v437
        %vm495 = vcmp.eq.s32.totalorder %v271, %v437
        %vm496 = vcmp.eq.s32.totalorder %v272, %v437
        %vm497 = vcmp.eq.s32.totalorder %v273, %v437
        %vm498 = vcmp.eq.s32.totalorder %v270, %v440
        %vm499 = vcmp.eq.s32.totalorder %v271, %v440
        %vm500 = vcmp.eq.s32.totalorder %v272, %v440
        %vm501 = vcmp.eq.s32.totalorder %v273, %v440
        %vm502 = vcmp.eq.s32.totalorder %v270, %v443
        %vm503 = vcmp.eq.s32.totalorder %v271, %v443
        %vm504 = vcmp.eq.s32.totalorder %v272, %v443
        %vm505 = vcmp.eq.s32.totalorder %v273, %v443
        %vm506 = vcmp.eq.s32.totalorder %v270, %v446
        %vm507 = vcmp.eq.s32.totalorder %v271, %v446
        %vm508 = vcmp.eq.s32.totalorder %v272, %v446
        %vm509 = vcmp.eq.s32.totalorder %v273, %v446
        %vm510 = vcmp.eq.s32.totalorder %v270, %v449
        %vm511 = vcmp.eq.s32.totalorder %v271, %v449
        %vm512 = vcmp.eq.s32.totalorder %v272, %v449
        %vm513 = vcmp.eq.s32.totalorder %v273, %v449
        %vm514 = vmor %vm322, %vm450
        %vm515 = vmor %vm323, %vm451
        %vm516 = vmor %vm324, %vm452
        %vm517 = vmor %vm325, %vm453
        %vm518 = vmor %vm326, %vm454
        %vm519 = vmor %vm327, %vm455
        %vm520 = vmor %vm328, %vm456
        %vm521 = vmor %vm329, %vm457
        %vm522 = vmor %vm330, %vm458
        %vm523 = vmor %vm331, %vm459
        %vm524 = vmor %vm332, %vm460
        %vm525 = vmor %vm333, %vm461
        %vm526 = vmor %vm334, %vm462
        %vm527 = vmor %vm335, %vm463
        %vm528 = vmor %vm336, %vm464
        %vm529 = vmor %vm337, %vm465
        %vm530 = vmor %vm338, %vm466
        %vm531 = vmor %vm339, %vm467
        %vm532 = vmor %vm340, %vm468
        %vm533 = vmor %vm341, %vm469
        %vm534 = vmor %vm342, %vm470
        %vm535 = vmor %vm343, %vm471
        %vm536 = vmor %vm344, %vm472
        %vm537 = vmor %vm345, %vm473
        %vm538 = vmor %vm346, %vm474
        %vm539 = vmor %vm347, %vm475
        %vm540 = vmor %vm348, %vm476
        %vm541 = vmor %vm349, %vm477
        %vm542 = vmor %vm350, %vm478
        %vm543 = vmor %vm351, %vm479
        %vm544 = vmor %vm352, %vm480
        %vm545 = vmor %vm353, %vm481
        %vm546 = vmor %vm354, %vm482
        %vm547 = vmor %vm355, %vm483
        %vm548 = vmor %vm356, %vm484
        %vm549 = vmor %vm357, %vm485
        %vm550 = vmor %vm358, %vm486
        %vm551 = vmor %vm359, %vm487
        %vm552 = vmor %vm360, %vm488
        %vm553 = vmor %vm361, %vm489
        %vm554 = vmor %vm362, %vm490
        %vm555 = vmor %vm363, %vm491
        %vm556 = vmor %vm364, %vm492
        %vm557 = vmor %vm365, %vm493
        %vm558 = vmor %vm366, %vm494
        %vm559 = vmor %vm367, %vm495
        %vm560 = vmor %vm368, %vm496
        %vm561 = vmor %vm369, %vm497
        %vm562 = vmor %vm370, %vm498
        %vm563 = vmor %vm371, %vm499
        %vm564 = vmor %vm372, %vm500
        %vm565 = vmor %vm373, %vm501
        %vm566 = vmor %vm374, %vm502
        %vm567 = vmor %vm375, %vm503
        %vm568 = vmor %vm376, %vm504
        %vm569 = vmor %vm377, %vm505
        %vm570 = vmor %vm378, %vm506
        %vm571 = vmor %vm379, %vm507
        %vm572 = vmor %vm380, %vm508
        %vm573 = vmor %vm381, %vm509
        %vm574 = vmor %vm382, %vm510
        %vm575 = vmor %vm383, %vm511
        %vm576 = vmor %vm384, %vm512
        %vm577 = vmor %vm385, %vm513
        %v578 = vsel %vm514, 1, 0
        %v579 = vsel %vm515, 1, 0
        %v580 = vsel %vm516, 1, 0
        %v581 = vsel %vm517, 1, 0
        %v582 = vsel %vm518, 1, 0
        %v583 = vsel %vm519, 1, 0
        %v584 = vsel %vm520, 1, 0
        %v585 = vsel %vm521, 1, 0
        %v586 = vsel %vm522, 1, 0
        %v587 = vsel %vm523, 1, 0
        %v588 = vsel %vm524, 1, 0
        %v589 = vsel %vm525, 1, 0
        %v590 = vsel %vm526, 1, 0
        %v591 = vsel %vm527, 1, 0
        %v592 = vsel %vm528, 1, 0
        %v593 = vsel %vm529, 1, 0
        %v594 = vsel %vm530, 1, 0
        %v595 = vsel %vm531, 1, 0
        %v596 = vsel %vm532, 1, 0
        %v597 = vsel %vm533, 1, 0
        %v598 = vsel %vm534, 1, 0
        %v599 = vsel %vm535, 1, 0
        %v600 = vsel %vm536, 1, 0
        %v601 = vsel %vm537, 1, 0
        %v602 = vsel %vm538, 1, 0
        %v603 = vsel %vm539, 1, 0
        %v604 = vsel %vm540, 1, 0
        %v605 = vsel %vm541, 1, 0
        %v606 = vsel %vm542, 1, 0
        %v607 = vsel %vm543, 1, 0
        %v608 = vsel %vm544, 1, 0
        %v609 = vsel %vm545, 1, 0
        %v610 = vsel %vm546, 1, 0
        %v611 = vsel %vm547, 1, 0
        %v612 = vsel %vm548, 1, 0
        %v613 = vsel %vm549, 1, 0
        %v614 = vsel %vm550, 1, 0
        %v615 = vsel %vm551, 1, 0
        %v616 = vsel %vm552, 1, 0
        %v617 = vsel %vm553, 1, 0
        %v618 = vsel %vm554, 1, 0
        %v619 = vsel %vm555, 1, 0
        %v620 = vsel %vm556, 1, 0
        %v621 = vsel %vm557, 1, 0
        %v622 = vsel %vm558, 1, 0
        %v623 = vsel %vm559, 1, 0
        %v624 = vsel %vm560, 1, 0
        %v625 = vsel %vm561, 1, 0
        %v626 = vsel %vm562, 1, 0
        %v627 = vsel %vm563, 1, 0
        %v628 = vsel %vm564, 1, 0
        %v629 = vsel %vm565, 1, 0
        %v630 = vsel %vm566, 1, 0
        %v631 = vsel %vm567, 1, 0
        %v632 = vsel %vm568, 1, 0
        %v633 = vsel %vm569, 1, 0
        %v634 = vsel %vm570, 1, 0
        %v635 = vsel %vm571, 1, 0
        %v636 = vsel %vm572, 1, 0
        %v637 = vsel %vm573, 1, 0
        %v638 = vsel %vm574, 1, 0
        %v639 = vsel %vm575, 1, 0
        %v640 = vsel %vm576, 1, 0
        %v641 = vsel %vm577, 1, 0
        %v642 = vcvt.s32.f32 %v578
        %v643 = vcvt.s32.f32 %v579
        %v644 = vcvt.s32.f32 %v580
        %v645 = vcvt.s32.f32 %v581
        %v646 = vcvt.s32.f32 %v582
        %v647 = vcvt.s32.f32 %v583
        %v648 = vcvt.s32.f32 %v584
        %v649 = vcvt.s32.f32 %v585
        %v650 = vcvt.s32.f32 %v586
        %v651 = vcvt.s32.f32 %v587
        %v652 = vcvt.s32.f32 %v588
        %v653 = vcvt.s32.f32 %v589
        %v654 = vcvt.s32.f32 %v590
        %v655 = vcvt.s32.f32 %v591
        %v656 = vcvt.s32.f32 %v592
        %v657 = vcvt.s32.f32 %v593
        %v658 = vcvt.s32.f32 %v594
        %v659 = vcvt.s32.f32 %v595
        %v660 = vcvt.s32.f32 %v596
        %v661 = vcvt.s32.f32 %v597
        %v662 = vcvt.s32.f32 %v598
        %v663 = vcvt.s32.f32 %v599
        %v664 = vcvt.s32.f32 %v600
        %v665 = vcvt.s32.f32 %v601
        %v666 = vcvt.s32.f32 %v602
        %v667 = vcvt.s32.f32 %v603
        %v668 = vcvt.s32.f32 %v604
        %v669 = vcvt.s32.f32 %v605
        %v670 = vcvt.s32.f32 %v606
        %v671 = vcvt.s32.f32 %v607
        %v672 = vcvt.s32.f32 %v608
        %v673 = vcvt.s32.f32 %v609
        %v674 = vcvt.s32.f32 %v610
        %v675 = vcvt.s32.f32 %v611
        %v676 = vcvt.s32.f32 %v612
        %v677 = vcvt.s32.f32 %v613
        %v678 = vcvt.s32.f32 %v614
        %v679 = vcvt.s32.f32 %v615
        %v680 = vcvt.s32.f32 %v616
        %v681 = vcvt.s32.f32 %v617
        %v682 = vcvt.s32.f32 %v618
        %v683 = vcvt.s32.f32 %v619
        %v684 = vcvt.s32.f32 %v620
        %v685 = vcvt.s32.f32 %v621
        %v686 = vcvt.s32.f32 %v622
        %v687 = vcvt.s32.f32 %v623
        %v688 = vcvt.s32.f32 %v624
        %v689 = vcvt.s32.f32 %v625
        %v690 = vcvt.s32.f32 %v626
        %v691 = vcvt.s32.f32 %v627
        %v692 = vcvt.s32.f32 %v628
        %v693 = vcvt.s32.f32 %v629
        %v694 = vcvt.s32.f32 %v630
        %v695 = vcvt.s32.f32 %v631
        %v696 = vcvt.s32.f32 %v632
        %v697 = vcvt.s32.f32 %v633
        %v698 = vcvt.s32.f32 %v634
        %v699 = vcvt.s32.f32 %v635
        %v700 = vcvt.s32.f32 %v636
        %v701 = vcvt.s32.f32 %v637
        %v702 = vcvt.s32.f32 %v638
        %v703 = vcvt.s32.f32 %v639
        %v704 = vcvt.s32.f32 %v640
        %v705 = vcvt.s32.f32 %v641
        %v706 = vpack.c.bf16 %v646, %v642
        %v707 = vpack.c.bf16 %v647, %v643
        %v708 = vpack.c.bf16 %v648, %v644
        %v709 = vpack.c.bf16 %v649, %v645
        %v710 = vpack.c.bf16 %v654, %v650
        %v711 = vpack.c.bf16 %v655, %v651
        %v712 = vpack.c.bf16 %v656, %v652
        %v713 = vpack.c.bf16 %v657, %v653
        %v714 = vpack.c.bf16 %v662, %v658
        %v715 = vpack.c.bf16 %v663, %v659
        %v716 = vpack.c.bf16 %v664, %v660
        %v717 = vpack.c.bf16 %v665, %v661
        %v718 = vpack.c.bf16 %v670, %v666
        %v719 = vpack.c.bf16 %v671, %v667
        %v720 = vpack.c.bf16 %v672, %v668
        %v721 = vpack.c.bf16 %v673, %v669
        %v722 = vpack.c.bf16 %v678, %v674
        %v723 = vpack.c.bf16 %v679, %v675
        %v724 = vpack.c.bf16 %v680, %v676
        %v725 = vpack.c.bf16 %v681, %v677
        %v726 = vpack.c.bf16 %v686, %v682
        %v727 = vpack.c.bf16 %v687, %v683
        %v728 = vpack.c.bf16 %v688, %v684
        %v729 = vpack.c.bf16 %v689, %v685
        %v730 = vpack.c.bf16 %v694, %v690
        %v731 = vpack.c.bf16 %v695, %v691
        %v732 = vpack.c.bf16 %v696, %v692
        %v733 = vpack.c.bf16 %v697, %v693
        %v734 = vpack.c.bf16 %v702, %v698
        %v735 = vpack.c.bf16 %v703, %v699
        %v736 = vpack.c.bf16 %v704, %v700
        %v737 = vpack.c.bf16 %v705, %v701
        %v738 = vld [vmem:[%s1] sm:$0xf]
        %v739 = vld [vmem:[%s1 + $0x4] sm:$0xf]
        %v740 = vld [vmem:[%s1 + $0x8] sm:$0xf]
        %v741 = vld [vmem:[%s1 + $0xc] sm:$0xf]
        %v742 = vld [vmem:[%s1 + $0x10] sm:$0xf]
        %v743 = vld [vmem:[%s1 + $0x14] sm:$0xf]
        %v744 = vld [vmem:[%s1 + $0x18] sm:$0xf]
        %v745 = vld [vmem:[%s1 + $0x1c] sm:$0xf]
        %v746 = vld [vmem:[%s1 + $0x20] sm:$0xf]
        %v747 = vld [vmem:[%s1 + $0x24] sm:$0xf]
        %v748 = vld [vmem:[%s1 + $0x28] sm:$0xf]
        %v749 = vld [vmem:[%s1 + $0x2c] sm:$0xf]
        %v750 = vld [vmem:[%s1 + $0x30] sm:$0xf]
        %v751 = vld [vmem:[%s1 + $0x34] sm:$0xf]
        %v752 = vld [vmem:[%s1 + $0x38] sm:$0xf]
        %v753 = vld [vmem:[%s1 + $0x3c] sm:$0xf]
        %v754 = vld [vmem:[%s1 + $0x40] sm:$0xf]
        %v755 = vld [vmem:[%s1 + $0x44] sm:$0xf]
        %v756 = vld [vmem:[%s1 + $0x48] sm:$0xf]
        %v757 = vld [vmem:[%s1 + $0x4c] sm:$0xf]
        %v758 = vld [vmem:[%s1 + $0x50] sm:$0xf]
        %v759 = vld [vmem:[%s1 + $0x54] sm:$0xf]
        %v760 = vld [vmem:[%s1 + $0x58] sm:$0xf]
        %v761 = vld [vmem:[%s1 + $0x5c] sm:$0xf]
        %v762 = vld [vmem:[%s1 + $0x60] sm:$0xf]
        %v763 = vld [vmem:[%s1 + $0x64] sm:$0xf]
        %v764 = vld [vmem:[%s1 + $0x68] sm:$0xf]
        %v765 = vld [vmem:[%s1 + $0x6c] sm:$0xf]
        %v766 = vld [vmem:[%s1 + $0x70] sm:$0xf]
        %v767 = vld [vmem:[%s1 + $0x74] sm:$0xf]
        %v768 = vld [vmem:[%s1 + $0x78] sm:$0xf]
        %v769 = vld [vmem:[%s1 + $0x7c] sm:$0xf]
        %v770 = vld [vmem:[%s1 + $0x80] sm:$0xf]
        %v771 = vld [vmem:[%s1 + $0x84] sm:$0xf]
        %v772 = vld [vmem:[%s1 + $0x88] sm:$0xf]
        %v773 = vld [vmem:[%s1 + $0x8c] sm:$0xf]
        %v774 = vld [vmem:[%s1 + $0x90] sm:$0xf]
        %v775 = vld [vmem:[%s1 + $0x94] sm:$0xf]
        %v776 = vld [vmem:[%s1 + $0x98] sm:$0xf]
        %v777 = vld [vmem:[%s1 + $0x9c] sm:$0xf]
        %v778 = vld [vmem:[%s1 + $0xa0] sm:$0xf]
        %v779 = vld [vmem:[%s1 + $0xa4] sm:$0xf]
        %v780 = vld [vmem:[%s1 + $0xa8] sm:$0xf]
        %v781 = vld [vmem:[%s1 + $0xac] sm:$0xf]
        %v782 = vld [vmem:[%s1 + $0xb0] sm:$0xf]
        %v783 = vld [vmem:[%s1 + $0xb4] sm:$0xf]
        %v784 = vld [vmem:[%s1 + $0xb8] sm:$0xf]
        %v785 = vld [vmem:[%s1 + $0xbc] sm:$0xf]
        %v786 = vld [vmem:[%s1 + $0xc0] sm:$0xf]
        %v787 = vld [vmem:[%s1 + $0xc4] sm:$0xf]
        %v788 = vld [vmem:[%s1 + $0xc8] sm:$0xf]
        %v789 = vld [vmem:[%s1 + $0xcc] sm:$0xf]
        %v790 = vld [vmem:[%s1 + $0xd0] sm:$0xf]
        %v791 = vld [vmem:[%s1 + $0xd4] sm:$0xf]
        %v792 = vld [vmem:[%s1 + $0xd8] sm:$0xf]
        %v793 = vld [vmem:[%s1 + $0xdc] sm:$0xf]
        %v794 = vld [vmem:[%s1 + $0xe0] sm:$0xf]
        %v795 = vld [vmem:[%s1 + $0xe4] sm:$0xf]
        %v796 = vld [vmem:[%s1 + $0xe8] sm:$0xf]
        %v797 = vld [vmem:[%s1 + $0xec] sm:$0xf]
        %v798 = vld [vmem:[%s1 + $0xf0] sm:$0xf]
        %v799 = vld [vmem:[%s1 + $0xf4] sm:$0xf]
        %v800 = vld [vmem:[%s1 + $0xf8] sm:$0xf]
        %v801 = vld [vmem:[%s1 + $0xfc] sm:$0xf]
        %v866 = vunpack.c.l.b16 %v738
        %v867 = vunpack.c.l.b16 %v739
        %v868 = vunpack.c.l.b16 %v740
        %v869 = vunpack.c.l.b16 %v741
        %v870 = vunpack.c.l.b16 %v742
        %v871 = vunpack.c.l.b16 %v743
        %v872 = vunpack.c.l.b16 %v744
        %v873 = vunpack.c.l.b16 %v745
        %v874 = vunpack.c.l.b16 %v746
        %v875 = vunpack.c.l.b16 %v747
        %v876 = vunpack.c.l.b16 %v748
        %v877 = vunpack.c.l.b16 %v749
        %v878 = vunpack.c.l.b16 %v750
        %v879 = vunpack.c.l.b16 %v751
        %v880 = vunpack.c.l.b16 %v752
        %v881 = vunpack.c.l.b16 %v753
        %v882 = vunpack.c.l.b16 %v754
        %v883 = vunpack.c.l.b16 %v755
        %v884 = vunpack.c.l.b16 %v756
        %v885 = vunpack.c.l.b16 %v757
        %v886 = vunpack.c.l.b16 %v758
        %v887 = vunpack.c.l.b16 %v759
        %v888 = vunpack.c.l.b16 %v760
        %v889 = vunpack.c.l.b16 %v761
        %v890 = vunpack.c.l.b16 %v762
        %v891 = vunpack.c.l.b16 %v763
        %v892 = vunpack.c.l.b16 %v764
        %v893 = vunpack.c.l.b16 %v765
        %v894 = vunpack.c.l.b16 %v766
        %v895 = vunpack.c.l.b16 %v767
        %v896 = vunpack.c.l.b16 %v768
        %v897 = vunpack.c.l.b16 %v769
        %v898 = vunpack.c.l.b16 %v770
        %v899 = vunpack.c.l.b16 %v771
        %v900 = vunpack.c.l.b16 %v772
        %v901 = vunpack.c.l.b16 %v773
        %v902 = vunpack.c.l.b16 %v774
        %v903 = vunpack.c.l.b16 %v775
        %v904 = vunpack.c.l.b16 %v776
        %v905 = vunpack.c.l.b16 %v777
        %v906 = vunpack.c.l.b16 %v778
        %v907 = vunpack.c.l.b16 %v779
        %v908 = vunpack.c.l.b16 %v780
        %v909 = vunpack.c.l.b16 %v781
        %v910 = vunpack.c.l.b16 %v782
        %v911 = vunpack.c.l.b16 %v783
        %v912 = vunpack.c.l.b16 %v784
        %v913 = vunpack.c.l.b16 %v785
        %v914 = vunpack.c.l.b16 %v786
        %v915 = vunpack.c.l.b16 %v787
        %v916 = vunpack.c.l.b16 %v788
        %v917 = vunpack.c.l.b16 %v789
        %v918 = vunpack.c.l.b16 %v790
        %v919 = vunpack.c.l.b16 %v791
        %v920 = vunpack.c.l.b16 %v792
        %v921 = vunpack.c.l.b16 %v793
        %v922 = vunpack.c.l.b16 %v794
        %v923 = vunpack.c.l.b16 %v795
        %v924 = vunpack.c.l.b16 %v796
        %v925 = vunpack.c.l.b16 %v797
        %v926 = vunpack.c.l.b16 %v798
        %v927 = vunpack.c.l.b16 %v799
        %v928 = vunpack.c.l.b16 %v800
        %v929 = vunpack.c.l.b16 %v801
        %v930 = vpack.c.b16 %v867, %v866
        %v931 = vpack.c.b16 %v869, %v868
        %v932 = vpack.c.b16 %v871, %v870
        %v933 = vpack.c.b16 %v873, %v872
        %v934 = vpack.c.b16 %v875, %v874
        %v935 = vpack.c.b16 %v877, %v876
        %v936 = vpack.c.b16 %v879, %v878
        %v937 = vpack.c.b16 %v881, %v880
        %v938 = vpack.c.b16 %v883, %v882
        %v939 = vpack.c.b16 %v885, %v884
        %v940 = vpack.c.b16 %v887, %v886
        %v941 = vpack.c.b16 %v889, %v888
        %v942 = vpack.c.b16 %v891, %v890
        %v943 = vpack.c.b16 %v893, %v892
        %v944 = vpack.c.b16 %v895, %v894
        %v945 = vpack.c.b16 %v897, %v896
        %v946 = vpack.c.b16 %v899, %v898
        %v947 = vpack.c.b16 %v901, %v900
        %v948 = vpack.c.b16 %v903, %v902
        %v949 = vpack.c.b16 %v905, %v904
        %v950 = vpack.c.b16 %v907, %v906
        %v951 = vpack.c.b16 %v909, %v908
        %v952 = vpack.c.b16 %v911, %v910
        %v953 = vpack.c.b16 %v913, %v912
        %v954 = vpack.c.b16 %v915, %v914
        %v955 = vpack.c.b16 %v917, %v916
        %v956 = vpack.c.b16 %v919, %v918
        %v957 = vpack.c.b16 %v921, %v920
        %v958 = vpack.c.b16 %v923, %v922
        %v959 = vpack.c.b16 %v925, %v924
        %v960 = vpack.c.b16 %v927, %v926
        %v961 = vpack.c.b16 %v929, %v928
        %994 = vmatpush.bf16.msra.mxu0 %v937
        %995 = vmatpush.bf16.msra.mxu0 %v936
        %996 = vmatpush.bf16.msra.mxu0 %v935
        %997 = vmatpush.bf16.msra.mxu0 %v934
        %998 = vmatpush.bf16.msra.mxu0 %v933
        %999 = vmatpush.bf16.msra.mxu0 %v932
        %1000 = vmatpush.bf16.msra.mxu0 %v931
        %1001 = vmatpush.bf16.msra.mxu0 %v930
        %1002 = vmatmul.bf16.gmra.mxu0 %v706
        %v1003 = vpop.f32.mrf.mxu0
        %v1004 = vadd.f32 0.0, %v1003
        %v1005 = vpop.f32.mrf.mxu0
        %v1006 = vadd.f32 0.0, %v1005
        %1007 = vmatmul.bf16.gmra.mxu0 %v710
        %v1008 = vpop.f32.mrf.mxu0
        %v1009 = vadd.f32 0.0, %v1008
        %v1010 = vpop.f32.mrf.mxu0
        %v1011 = vadd.f32 0.0, %v1010
        %1012 = vmatmul.bf16.gmra.mxu0 %v714
        %v1013 = vpop.f32.mrf.mxu0
        %v1014 = vadd.f32 0.0, %v1013
        %v1015 = vpop.f32.mrf.mxu0
        %v1016 = vadd.f32 0.0, %v1015
        %1017 = vmatmul.bf16.gmra.mxu0 %v718
        %v1018 = vpop.f32.mrf.mxu0
        %v1019 = vadd.f32 0.0, %v1018
        %v1020 = vpop.f32.mrf.mxu0
        %v1021 = vadd.f32 0.0, %v1020
        %1022 = vmatmul.bf16.gmra.mxu0 %v722
        %v1023 = vpop.f32.mrf.mxu0
        %v1024 = vadd.f32 0.0, %v1023
        %v1025 = vpop.f32.mrf.mxu0
        %v1026 = vadd.f32 0.0, %v1025
        %1027 = vmatmul.bf16.gmra.mxu0 %v726
        %v1028 = vpop.f32.mrf.mxu0
        %v1029 = vadd.f32 0.0, %v1028
        %v1030 = vpop.f32.mrf.mxu0
        %v1031 = vadd.f32 0.0, %v1030
        %1032 = vmatmul.bf16.gmra.mxu0 %v730
        %v1033 = vpop.f32.mrf.mxu0
        %v1034 = vadd.f32 0.0, %v1033
        %v1035 = vpop.f32.mrf.mxu0
        %v1036 = vadd.f32 0.0, %v1035
        %1037 = vmatmul.bf16.gmra.mxu0 %v734
        %v1038 = vpop.f32.mrf.mxu0
        %v1039 = vadd.f32 0.0, %v1038
        %v1040 = vpop.f32.mrf.mxu0
        %v1041 = vadd.f32 0.0, %v1040
        %1042 = vdwg.mxu0
        %1043 = vmatpush.bf16.msra.mxu0 %v945
        %1044 = vmatpush.bf16.msra.mxu0 %v944
        %1045 = vmatpush.bf16.msra.mxu0 %v943
        %1046 = vmatpush.bf16.msra.mxu0 %v942
        %1047 = vmatpush.bf16.msra.mxu0 %v941
        %1048 = vmatpush.bf16.msra.mxu0 %v940
        %1049 = vmatpush.bf16.msra.mxu0 %v939
        %1050 = vmatpush.bf16.msra.mxu0 %v938
        %1051 = vmatmul.bf16.gmra.mxu0 %v707
        %v1052 = vpop.f32.mrf.mxu0
        %v1053 = vadd.f32 %v1004, %v1052
        %v1054 = vpop.f32.mrf.mxu0
        %v1055 = vadd.f32 %v1006, %v1054
        %1056 = vmatmul.bf16.gmra.mxu0 %v711
        %v1057 = vpop.f32.mrf.mxu0
        %v1058 = vadd.f32 %v1009, %v1057
        %v1059 = vpop.f32.mrf.mxu0
        %v1060 = vadd.f32 %v1011, %v1059
        %1061 = vmatmul.bf16.gmra.mxu0 %v715
        %v1062 = vpop.f32.mrf.mxu0
        %v1063 = vadd.f32 %v1014, %v1062
        %v1064 = vpop.f32.mrf.mxu0
        %v1065 = vadd.f32 %v1016, %v1064
        %1066 = vmatmul.bf16.gmra.mxu0 %v719
        %v1067 = vpop.f32.mrf.mxu0
        %v1068 = vadd.f32 %v1019, %v1067
        %v1069 = vpop.f32.mrf.mxu0
        %v1070 = vadd.f32 %v1021, %v1069
        %1071 = vmatmul.bf16.gmra.mxu0 %v723
        %v1072 = vpop.f32.mrf.mxu0
        %v1073 = vadd.f32 %v1024, %v1072
        %v1074 = vpop.f32.mrf.mxu0
        %v1075 = vadd.f32 %v1026, %v1074
        %1076 = vmatmul.bf16.gmra.mxu0 %v727
        %v1077 = vpop.f32.mrf.mxu0
        %v1078 = vadd.f32 %v1029, %v1077
        %v1079 = vpop.f32.mrf.mxu0
        %v1080 = vadd.f32 %v1031, %v1079
        %1081 = vmatmul.bf16.gmra.mxu0 %v731
        %v1082 = vpop.f32.mrf.mxu0
        %v1083 = vadd.f32 %v1034, %v1082
        %v1084 = vpop.f32.mrf.mxu0
        %v1085 = vadd.f32 %v1036, %v1084
        %1086 = vmatmul.bf16.gmra.mxu0 %v735
        %v1087 = vpop.f32.mrf.mxu0
        %v1088 = vadd.f32 %v1039, %v1087
        %v1089 = vpop.f32.mrf.mxu0
        %v1090 = vadd.f32 %v1041, %v1089
        %1091 = vdwg.mxu0
        %1092 = vmatpush.bf16.msra.mxu0 %v953
        %1093 = vmatpush.bf16.msra.mxu0 %v952
        %1094 = vmatpush.bf16.msra.mxu0 %v951
        %1095 = vmatpush.bf16.msra.mxu0 %v950
        %1096 = vmatpush.bf16.msra.mxu0 %v949
        %1097 = vmatpush.bf16.msra.mxu0 %v948
        %1098 = vmatpush.bf16.msra.mxu0 %v947
        %1099 = vmatpush.bf16.msra.mxu0 %v946
        %1100 = vmatmul.bf16.gmra.mxu0 %v708
        %v1101 = vpop.f32.mrf.mxu0
        %v1102 = vadd.f32 %v1053, %v1101
        %v1103 = vpop.f32.mrf.mxu0
        %v1104 = vadd.f32 %v1055, %v1103
        %1105 = vmatmul.bf16.gmra.mxu0 %v712
        %v1106 = vpop.f32.mrf.mxu0
        %v1107 = vadd.f32 %v1058, %v1106
        %v1108 = vpop.f32.mrf.mxu0
        %v1109 = vadd.f32 %v1060, %v1108
        %1110 = vmatmul.bf16.gmra.mxu0 %v716
        %v1111 = vpop.f32.mrf.mxu0
        %v1112 = vadd.f32 %v1063, %v1111
        %v1113 = vpop.f32.mrf.mxu0
        %v1114 = vadd.f32 %v1065, %v1113
        %1115 = vmatmul.bf16.gmra.mxu0 %v720
        %v1116 = vpop.f32.mrf.mxu0
        %v1117 = vadd.f32 %v1068, %v1116
        %v1118 = vpop.f32.mrf.mxu0
        %v1119 = vadd.f32 %v1070, %v1118
        %1120 = vmatmul.bf16.gmra.mxu0 %v724
        %v1121 = vpop.f32.mrf.mxu0
        %v1122 = vadd.f32 %v1073, %v1121
        %v1123 = vpop.f32.mrf.mxu0
        %v1124 = vadd.f32 %v1075, %v1123
        %1125 = vmatmul.bf16.gmra.mxu0 %v728
        %v1126 = vpop.f32.mrf.mxu0
        %v1127 = vadd.f32 %v1078, %v1126
        %v1128 = vpop.f32.mrf.mxu0
        %v1129 = vadd.f32 %v1080, %v1128
        %1130 = vmatmul.bf16.gmra.mxu0 %v732
        %v1131 = vpop.f32.mrf.mxu0
        %v1132 = vadd.f32 %v1083, %v1131
        %v1133 = vpop.f32.mrf.mxu0
        %v1134 = vadd.f32 %v1085, %v1133
        %1135 = vmatmul.bf16.gmra.mxu0 %v736
        %v1136 = vpop.f32.mrf.mxu0
        %v1137 = vadd.f32 %v1088, %v1136
        %v1138 = vpop.f32.mrf.mxu0
        %v1139 = vadd.f32 %v1090, %v1138
        %1140 = vdwg.mxu0
        %1141 = vmatpush.bf16.msra.mxu0 %v961
        %1142 = vmatpush.bf16.msra.mxu0 %v960
        %1143 = vmatpush.bf16.msra.mxu0 %v959
        %1144 = vmatpush.bf16.msra.mxu0 %v958
        %1145 = vmatpush.bf16.msra.mxu0 %v957
        %1146 = vmatpush.bf16.msra.mxu0 %v956
        %1147 = vmatpush.bf16.msra.mxu0 %v955
        %1148 = vmatpush.bf16.msra.mxu0 %v954
        %1149 = vmatmul.bf16.gmra.mxu0 %v709
        %v1150 = vpop.f32.mrf.mxu0
        %v1151 = vadd.f32 %v1102, %v1150
        %v1152 = vpop.f32.mrf.mxu0
        %v1153 = vadd.f32 %v1104, %v1152
        %1154 = vmatmul.bf16.gmra.mxu0 %v713
        %v1155 = vpop.f32.mrf.mxu0
        %v1156 = vadd.f32 %v1107, %v1155
        %v1157 = vpop.f32.mrf.mxu0
        %v1158 = vadd.f32 %v1109, %v1157
        %1159 = vmatmul.bf16.gmra.mxu0 %v717
        %v1160 = vpop.f32.mrf.mxu0
        %v1161 = vadd.f32 %v1112, %v1160
        %v1162 = vpop.f32.mrf.mxu0
        %v1163 = vadd.f32 %v1114, %v1162
        %1164 = vmatmul.bf16.gmra.mxu0 %v721
        %v1165 = vpop.f32.mrf.mxu0
        %v1166 = vadd.f32 %v1117, %v1165
        %v1167 = vpop.f32.mrf.mxu0
        %v1168 = vadd.f32 %v1119, %v1167
        %1169 = vmatmul.bf16.gmra.mxu0 %v725
        %v1170 = vpop.f32.mrf.mxu0
        %v1171 = vadd.f32 %v1122, %v1170
        %v1172 = vpop.f32.mrf.mxu0
        %v1173 = vadd.f32 %v1124, %v1172
        %1174 = vmatmul.bf16.gmra.mxu0 %v729
        %v1175 = vpop.f32.mrf.mxu0
        %v1176 = vadd.f32 %v1127, %v1175
        %v1177 = vpop.f32.mrf.mxu0
        %v1178 = vadd.f32 %v1129, %v1177
        %1179 = vmatmul.bf16.gmra.mxu0 %v733
        %v1180 = vpop.f32.mrf.mxu0
        %v1181 = vadd.f32 %v1132, %v1180
        %v1182 = vpop.f32.mrf.mxu0
        %v1183 = vadd.f32 %v1134, %v1182
        %1184 = vmatmul.bf16.gmra.mxu0 %v737
        %v1185 = vpop.f32.mrf.mxu0
        %v1186 = vadd.f32 %v1137, %v1185
        %v1187 = vpop.f32.mrf.mxu0
        %v1188 = vadd.f32 %v1139, %v1187
        %1189 = vdwg.mxu0
        %v1190 = vpack.c.bf16 %v1153, %v1151
        %v1191 = vpack.c.bf16 %v1158, %v1156
        %v1192 = vpack.c.bf16 %v1163, %v1161
        %v1193 = vpack.c.bf16 %v1168, %v1166
        %v1194 = vpack.c.bf16 %v1173, %v1171
        %v1195 = vpack.c.bf16 %v1178, %v1176
        %v1196 = vpack.c.bf16 %v1183, %v1181
        %v1197 = vpack.c.bf16 %v1188, %v1186
        %v1198 = vld [vmem:[%s2] sm:$0xf]
        %v1199 = vld [vmem:[%s2 + $0x4] sm:$0xf]
        %v1200 = vld [vmem:[%s2 + $0x8] sm:$0xf]
        %v1201 = vld [vmem:[%s2 + $0xc] sm:$0xf]
        %v1202 = vld [vmem:[%s2 + $0x10] sm:$0xf]
        %v1203 = vld [vmem:[%s2 + $0x14] sm:$0xf]
        %v1204 = vld [vmem:[%s2 + $0x18] sm:$0xf]
        %v1205 = vld [vmem:[%s2 + $0x1c] sm:$0xf]
        %v1206 = vld [vmem:[%s2 + $0x20] sm:$0xf]
        %v1207 = vld [vmem:[%s2 + $0x24] sm:$0xf]
        %v1208 = vld [vmem:[%s2 + $0x28] sm:$0xf]
        %v1209 = vld [vmem:[%s2 + $0x2c] sm:$0xf]
        %v1210 = vld [vmem:[%s2 + $0x30] sm:$0xf]
        %v1211 = vld [vmem:[%s2 + $0x34] sm:$0xf]
        %v1212 = vld [vmem:[%s2 + $0x38] sm:$0xf]
        %v1213 = vld [vmem:[%s2 + $0x3c] sm:$0xf]
        %v1214 = vld [vmem:[%s3] sm:$0x1]
        %v1216 = vperm.slane %v1214, 0
        %v1234 = vunpack.c.l.b16 %v1198
        %v1235 = vunpack.c.l.b16 %v1199
        %v1236 = vunpack.c.l.b16 %v1200
        %v1237 = vunpack.c.l.b16 %v1201
        %v1238 = vunpack.c.l.b16 %v1202
        %v1239 = vunpack.c.l.b16 %v1203
        %v1240 = vunpack.c.l.b16 %v1204
        %v1241 = vunpack.c.l.b16 %v1205
        %v1242 = vunpack.c.l.b16 %v1206
        %v1243 = vunpack.c.l.b16 %v1207
        %v1244 = vunpack.c.l.b16 %v1208
        %v1245 = vunpack.c.l.b16 %v1209
        %v1246 = vunpack.c.l.b16 %v1210
        %v1247 = vunpack.c.l.b16 %v1211
        %v1248 = vunpack.c.l.b16 %v1212
        %v1249 = vunpack.c.l.b16 %v1213
        %v1250 = vpack.c.b16 %v1235, %v1234
        %v1251 = vpack.c.b16 %v1237, %v1236
        %v1252 = vpack.c.b16 %v1239, %v1238
        %v1253 = vpack.c.b16 %v1241, %v1240
        %v1254 = vpack.c.b16 %v1243, %v1242
        %v1255 = vpack.c.b16 %v1245, %v1244
        %v1256 = vpack.c.b16 %v1247, %v1246
        %v1257 = vpack.c.b16 %v1249, %v1248
        %1266 = vmatpush.bf16.msra.mxu0 %v1257
        %1267 = vmatpush.bf16.msra.mxu0 %v1256
        %1268 = vmatpush.bf16.msra.mxu0 %v1255
        %1269 = vmatpush.bf16.msra.mxu0 %v1254
        %1270 = vmatpush.bf16.msra.mxu0 %v1253
        %1271 = vmatpush.bf16.msra.mxu0 %v1252
        %1272 = vmatpush.bf16.msra.mxu0 %v1251
        %1273 = vmatpush.bf16.msra.mxu0 %v1250
        %1274 = vmatmul.bf16.gmra.mxu0 %v1190
        %v1275 = vpop.f32.mrf.mxu0
        %v1276 = vadd.f32 %v1216, %v1275
        %v1277 = vpop.f32.mrf.mxu0
        %v1278 = vadd.f32 %v1216, %v1277
        %1279 = vmatmul.bf16.gmra.mxu0 %v1191
        %v1280 = vpop.f32.mrf.mxu0
        %v1281 = vadd.f32 %v1216, %v1280
        %v1282 = vpop.f32.mrf.mxu0
        %v1283 = vadd.f32 %v1216, %v1282
        %1284 = vmatmul.bf16.gmra.mxu0 %v1192
        %v1285 = vpop.f32.mrf.mxu0
        %v1286 = vadd.f32 %v1216, %v1285
        %v1287 = vpop.f32.mrf.mxu0
        %v1288 = vadd.f32 %v1216, %v1287
        %1289 = vmatmul.bf16.gmra.mxu0 %v1193
        %v1290 = vpop.f32.mrf.mxu0
        %v1291 = vadd.f32 %v1216, %v1290
        %v1292 = vpop.f32.mrf.mxu0
        %v1293 = vadd.f32 %v1216, %v1292
        %1294 = vmatmul.bf16.gmra.mxu0 %v1194
        %v1295 = vpop.f32.mrf.mxu0
        %v1296 = vadd.f32 %v1216, %v1295
        %v1297 = vpop.f32.mrf.mxu0
        %v1298 = vadd.f32 %v1216, %v1297
        %1299 = vmatmul.bf16.gmra.mxu0 %v1195
        %v1300 = vpop.f32.mrf.mxu0
        %v1301 = vadd.f32 %v1216, %v1300
        %v1302 = vpop.f32.mrf.mxu0
        %v1303 = vadd.f32 %v1216, %v1302
        %1304 = vmatmul.bf16.gmra.mxu0 %v1196
        %v1305 = vpop.f32.mrf.mxu0
        %v1306 = vadd.f32 %v1216, %v1305
        %v1307 = vpop.f32.mrf.mxu0
        %v1308 = vadd.f32 %v1216, %v1307
        %1309 = vmatmul.bf16.gmra.mxu0 %v1197
        %v1310 = vpop.f32.mrf.mxu0
        %v1311 = vadd.f32 %v1216, %v1310
        %v1312 = vpop.f32.mrf.mxu0
        %v1313 = vadd.f32 %v1216, %v1312
        %1314 = vdwg.mxu0
        %v1315 = vmax.f32 %v1276, 0.0
        %v1316 = vmax.f32 %v1278, 0.0
        %v1317 = vmax.f32 %v1281, 0.0
        %v1318 = vmax.f32 %v1283, 0.0
        %v1319 = vmax.f32 %v1286, 0.0
        %v1320 = vmax.f32 %v1288, 0.0
        %v1321 = vmax.f32 %v1291, 0.0
        %v1322 = vmax.f32 %v1293, 0.0
        %v1323 = vmax.f32 %v1296, 0.0
        %v1324 = vmax.f32 %v1298, 0.0
        %v1325 = vmax.f32 %v1301, 0.0
        %v1326 = vmax.f32 %v1303, 0.0
        %v1327 = vmax.f32 %v1306, 0.0
        %v1328 = vmax.f32 %v1308, 0.0
        %v1329 = vmax.f32 %v1311, 0.0
        %v1330 = vmax.f32 %v1313, 0.0
        %v1331 = vpack.c.bf16 %v1316, %v1315
        %v1332 = vpack.c.bf16 %v1318, %v1317
        %v1333 = vpack.c.bf16 %v1320, %v1319
        %v1334 = vpack.c.bf16 %v1322, %v1321
        %v1335 = vpack.c.bf16 %v1324, %v1323
        %v1336 = vpack.c.bf16 %v1326, %v1325
        %v1337 = vpack.c.bf16 %v1328, %v1327
        %v1338 = vpack.c.bf16 %v1330, %v1329
        %v1339 = vld [vmem:[%s4] sm:$0xff]
        %v1340 = vld [vmem:[%s4 + $0x8] sm:$0xff]
        %v1341 = vld [vmem:[%s4 + $0x10] sm:$0xff]
        %v1342 = vld [vmem:[%s4 + $0x18] sm:$0xff]
        %v1343 = vld [vmem:[%s4 + $0x20] sm:$0xff]
        %v1344 = vld [vmem:[%s4 + $0x28] sm:$0xff]
        %v1345 = vld [vmem:[%s4 + $0x30] sm:$0xff]
        %v1346 = vld [vmem:[%s4 + $0x38] sm:$0xff]
        %v1347 = vld [vmem:[%s4 + $0x40] sm:$0xff]
        %v1348 = vld [vmem:[%s4 + $0x48] sm:$0xff]
        %v1349 = vld [vmem:[%s4 + $0x50] sm:$0xff]
        %v1350 = vld [vmem:[%s4 + $0x58] sm:$0xff]
        %v1351 = vld [vmem:[%s4 + $0x60] sm:$0xff]
        %v1352 = vld [vmem:[%s4 + $0x68] sm:$0xff]
        %v1353 = vld [vmem:[%s4 + $0x70] sm:$0xff]
        %v1354 = vld [vmem:[%s4 + $0x78] sm:$0xff]
        %v1355 = vld [vmem:[%s5] sm:$0x3]
        %v1357 = vperm.slane %v1355, 0
        %v1358 = vperm.slane %v1355, 1
        %v1377 = vunpack.c.l.b16 %v1339
        %v1378 = vunpack.c.h.b16 %v1339
        %v1379 = vunpack.c.l.b16 %v1340
        %v1380 = vunpack.c.h.b16 %v1340
        %v1381 = vunpack.c.l.b16 %v1341
        %v1382 = vunpack.c.h.b16 %v1341
        %v1383 = vunpack.c.l.b16 %v1342
        %v1384 = vunpack.c.h.b16 %v1342
        %v1385 = vunpack.c.l.b16 %v1343
        %v1386 = vunpack.c.h.b16 %v1343
        %v1387 = vunpack.c.l.b16 %v1344
        %v1388 = vunpack.c.h.b16 %v1344
        %v1389 = vunpack.c.l.b16 %v1345
        %v1390 = vunpack.c.h.b16 %v1345
        %v1391 = vunpack.c.l.b16 %v1346
        %v1392 = vunpack.c.h.b16 %v1346
        %v1393 = vunpack.c.l.b16 %v1347
        %v1394 = vunpack.c.h.b16 %v1347
        %v1395 = vunpack.c.l.b16 %v1348
        %v1396 = vunpack.c.h.b16 %v1348
        %v1397 = vunpack.c.l.b16 %v1349
        %v1398 = vunpack.c.h.b16 %v1349
        %v1399 = vunpack.c.l.b16 %v1350
        %v1400 = vunpack.c.h.b16 %v1350
        %v1401 = vunpack.c.l.b16 %v1351
        %v1402 = vunpack.c.h.b16 %v1351
        %v1403 = vunpack.c.l.b16 %v1352
        %v1404 = vunpack.c.h.b16 %v1352
        %v1405 = vunpack.c.l.b16 %v1353
        %v1406 = vunpack.c.h.b16 %v1353
        %v1407 = vunpack.c.l.b16 %v1354
        %v1408 = vunpack.c.h.b16 %v1354
        %v1409 = vpack.c.b16 %v1379, %v1377
        %v1410 = vpack.c.b16 %v1380, %v1378
        %v1411 = vpack.c.b16 %v1383, %v1381
        %v1412 = vpack.c.b16 %v1384, %v1382
        %v1413 = vpack.c.b16 %v1387, %v1385
        %v1414 = vpack.c.b16 %v1388, %v1386
        %v1415 = vpack.c.b16 %v1391, %v1389
        %v1416 = vpack.c.b16 %v1392, %v1390
        %v1417 = vpack.c.b16 %v1395, %v1393
        %v1418 = vpack.c.b16 %v1396, %v1394
        %v1419 = vpack.c.b16 %v1399, %v1397
        %v1420 = vpack.c.b16 %v1400, %v1398
        %v1421 = vpack.c.b16 %v1403, %v1401
        %v1422 = vpack.c.b16 %v1404, %v1402
        %v1423 = vpack.c.b16 %v1407, %v1405
        %v1424 = vpack.c.b16 %v1408, %v1406
        %1441 = vmatpush.bf16.msra.mxu0 %v1423
        %1442 = vmatpush.bf16.msra.mxu0 %v1421
        %1443 = vmatpush.bf16.msra.mxu0 %v1419
        %1444 = vmatpush.bf16.msra.mxu0 %v1417
        %1445 = vmatpush.bf16.msra.mxu0 %v1415
        %1446 = vmatpush.bf16.msra.mxu0 %v1413
        %1447 = vmatpush.bf16.msra.mxu0 %v1411
        %1448 = vmatpush.bf16.msra.mxu0 %v1409
        %1449 = vmatmul.bf16.gmra.mxu0 %v1331
        %v1450 = vpop.f32.mrf.mxu0
        %v1451 = vadd.f32 %v1357, %v1450
        %v1452 = vpop.f32.mrf.mxu0
        %v1453 = vadd.f32 %v1357, %v1452
        %1454 = vmatmul.bf16.gmra.mxu0 %v1332
        %v1455 = vpop.f32.mrf.mxu0
        %v1456 = vadd.f32 %v1357, %v1455
        %v1457 = vpop.f32.mrf.mxu0
        %v1458 = vadd.f32 %v1357, %v1457
        %1459 = vmatmul.bf16.gmra.mxu0 %v1333
        %v1460 = vpop.f32.mrf.mxu0
        %v1461 = vadd.f32 %v1357, %v1460
        %v1462 = vpop.f32.mrf.mxu0
        %v1463 = vadd.f32 %v1357, %v1462
        %1464 = vmatmul.bf16.gmra.mxu0 %v1334
        %v1465 = vpop.f32.mrf.mxu0
        %v1466 = vadd.f32 %v1357, %v1465
        %v1467 = vpop.f32.mrf.mxu0
        %v1468 = vadd.f32 %v1357, %v1467
        %1469 = vmatmul.bf16.gmra.mxu0 %v1335
        %v1470 = vpop.f32.mrf.mxu0
        %v1471 = vadd.f32 %v1357, %v1470
        %v1472 = vpop.f32.mrf.mxu0
        %v1473 = vadd.f32 %v1357, %v1472
        %1474 = vmatmul.bf16.gmra.mxu0 %v1336
        %v1475 = vpop.f32.mrf.mxu0
        %v1476 = vadd.f32 %v1357, %v1475
        %v1477 = vpop.f32.mrf.mxu0
        %v1478 = vadd.f32 %v1357, %v1477
        %1479 = vmatmul.bf16.gmra.mxu0 %v1337
        %v1480 = vpop.f32.mrf.mxu0
        %v1481 = vadd.f32 %v1357, %v1480
        %v1482 = vpop.f32.mrf.mxu0
        %v1483 = vadd.f32 %v1357, %v1482
        %1484 = vmatmul.bf16.gmra.mxu0 %v1338
        %v1485 = vpop.f32.mrf.mxu0
        %v1486 = vadd.f32 %v1357, %v1485
        %v1487 = vpop.f32.mrf.mxu0
        %v1488 = vadd.f32 %v1357, %v1487
        %1489 = vdwg.mxu0
        %1490 = vmatpush.bf16.msra.mxu0 %v1424
        %1491 = vmatpush.bf16.msra.mxu0 %v1422
        %1492 = vmatpush.bf16.msra.mxu0 %v1420
        %1493 = vmatpush.bf16.msra.mxu0 %v1418
        %1494 = vmatpush.bf16.msra.mxu0 %v1416
        %1495 = vmatpush.bf16.msra.mxu0 %v1414
        %1496 = vmatpush.bf16.msra.mxu0 %v1412
        %1497 = vmatpush.bf16.msra.mxu0 %v1410
        %1498 = vmatmul.bf16.gmra.mxu0 %v1331
        %v1499 = vpop.f32.mrf.mxu0
        %v1500 = vadd.f32 %v1358, %v1499
        %v1501 = vpop.f32.mrf.mxu0
        %v1502 = vadd.f32 %v1358, %v1501
        %1503 = vmatmul.bf16.gmra.mxu0 %v1332
        %v1504 = vpop.f32.mrf.mxu0
        %v1505 = vadd.f32 %v1358, %v1504
        %v1506 = vpop.f32.mrf.mxu0
        %v1507 = vadd.f32 %v1358, %v1506
        %1508 = vmatmul.bf16.gmra.mxu0 %v1333
        %v1509 = vpop.f32.mrf.mxu0
        %v1510 = vadd.f32 %v1358, %v1509
        %v1511 = vpop.f32.mrf.mxu0
        %v1512 = vadd.f32 %v1358, %v1511
        %1513 = vmatmul.bf16.gmra.mxu0 %v1334
        %v1514 = vpop.f32.mrf.mxu0
        %v1515 = vadd.f32 %v1358, %v1514
        %v1516 = vpop.f32.mrf.mxu0
        %v1517 = vadd.f32 %v1358, %v1516
        %1518 = vmatmul.bf16.gmra.mxu0 %v1335
        %v1519 = vpop.f32.mrf.mxu0
        %v1520 = vadd.f32 %v1358, %v1519
        %v1521 = vpop.f32.mrf.mxu0
        %v1522 = vadd.f32 %v1358, %v1521
        %1523 = vmatmul.bf16.gmra.mxu0 %v1336
        %v1524 = vpop.f32.mrf.mxu0
        %v1525 = vadd.f32 %v1358, %v1524
        %v1526 = vpop.f32.mrf.mxu0
        %v1527 = vadd.f32 %v1358, %v1526
        %1528 = vmatmul.bf16.gmra.mxu0 %v1337
        %v1529 = vpop.f32.mrf.mxu0
        %v1530 = vadd.f32 %v1358, %v1529
        %v1531 = vpop.f32.mrf.mxu0
        %v1532 = vadd.f32 %v1358, %v1531
        %1533 = vmatmul.bf16.gmra.mxu0 %v1338
        %v1534 = vpop.f32.mrf.mxu0
        %v1535 = vadd.f32 %v1358, %v1534
        %v1536 = vpop.f32.mrf.mxu0
        %v1537 = vadd.f32 %v1358, %v1536
        %1538 = vdwg.mxu0
        %v1539 = vmax.f32 %v1451, %v1500
        %1540 = vmax.xlane.f32.xlu0 %v1539
        %v1541 = vpop.xlane.xlu0 %1540
        %v1542 = vmax.f32 %v1453, %v1502
        %1543 = vmax.xlane.f32.xlu0 %v1542
        %v1544 = vpop.xlane.xlu0 %1543
        %v1545 = vmax.f32 %v1456, %v1505
        %1546 = vmax.xlane.f32.xlu0 %v1545
        %v1547 = vpop.xlane.xlu0 %1546
        %v1548 = vmax.f32 %v1458, %v1507
        %1549 = vmax.xlane.f32.xlu0 %v1548
        %v1550 = vpop.xlane.xlu0 %1549
        %v1551 = vmax.f32 %v1461, %v1510
        %1552 = vmax.xlane.f32.xlu0 %v1551
        %v1553 = vpop.xlane.xlu0 %1552
        %v1554 = vmax.f32 %v1463, %v1512
        %1555 = vmax.xlane.f32.xlu0 %v1554
        %v1556 = vpop.xlane.xlu0 %1555
        %v1557 = vmax.f32 %v1466, %v1515
        %1558 = vmax.xlane.f32.xlu0 %v1557
        %v1559 = vpop.xlane.xlu0 %1558
        %v1560 = vmax.f32 %v1468, %v1517
        %1561 = vmax.xlane.f32.xlu0 %v1560
        %v1562 = vpop.xlane.xlu0 %1561
        %v1563 = vmax.f32 %v1471, %v1520
        %1564 = vmax.xlane.f32.xlu0 %v1563
        %v1565 = vpop.xlane.xlu0 %1564
        %v1566 = vmax.f32 %v1473, %v1522
        %1567 = vmax.xlane.f32.xlu0 %v1566
        %v1568 = vpop.xlane.xlu0 %1567
        %v1569 = vmax.f32 %v1476, %v1525
        %1570 = vmax.xlane.f32.xlu0 %v1569
        %v1571 = vpop.xlane.xlu0 %1570
        %v1572 = vmax.f32 %v1478, %v1527
        %1573 = vmax.xlane.f32.xlu0 %v1572
        %v1574 = vpop.xlane.xlu0 %1573
        %v1575 = vmax.f32 %v1481, %v1530
        %1576 = vmax.xlane.f32.xlu0 %v1575
        %v1577 = vpop.xlane.xlu0 %1576
        %v1578 = vmax.f32 %v1483, %v1532
        %1579 = vmax.xlane.f32.xlu0 %v1578
        %v1580 = vpop.xlane.xlu0 %1579
        %v1581 = vmax.f32 %v1486, %v1535
        %1582 = vmax.xlane.f32.xlu0 %v1581
        %v1583 = vpop.xlane.xlu0 %1582
        %v1584 = vmax.f32 %v1488, %v1537
        %1585 = vmax.xlane.f32.xlu0 %v1584
        %v1586 = vpop.xlane.xlu0 %1585
        %v1587 = vsub.f32 %v1451, %v1541
        %v1588 = vsub.f32 %v1500, %v1541
        %v1589 = vsub.f32 %v1453, %v1544
        %v1590 = vsub.f32 %v1502, %v1544
        %v1591 = vsub.f32 %v1456, %v1547
        %v1592 = vsub.f32 %v1505, %v1547
        %v1593 = vsub.f32 %v1458, %v1550
        %v1594 = vsub.f32 %v1507, %v1550
        %v1595 = vsub.f32 %v1461, %v1553
        %v1596 = vsub.f32 %v1510, %v1553
        %v1597 = vsub.f32 %v1463, %v1556
        %v1598 = vsub.f32 %v1512, %v1556
        %v1599 = vsub.f32 %v1466, %v1559
        %v1600 = vsub.f32 %v1515, %v1559
        %v1601 = vsub.f32 %v1468, %v1562
        %v1602 = vsub.f32 %v1517, %v1562
        %v1603 = vsub.f32 %v1471, %v1565
        %v1604 = vsub.f32 %v1520, %v1565
        %v1605 = vsub.f32 %v1473, %v1568
        %v1606 = vsub.f32 %v1522, %v1568
        %v1607 = vsub.f32 %v1476, %v1571
        %v1608 = vsub.f32 %v1525, %v1571
        %v1609 = vsub.f32 %v1478, %v1574
        %v1610 = vsub.f32 %v1527, %v1574
        %v1611 = vsub.f32 %v1481, %v1577
        %v1612 = vsub.f32 %v1530, %v1577
        %v1613 = vsub.f32 %v1483, %v1580
        %v1614 = vsub.f32 %v1532, %v1580
        %v1615 = vsub.f32 %v1486, %v1583
        %v1616 = vsub.f32 %v1535, %v1583
        %v1617 = vsub.f32 %v1488, %v1586
        %v1618 = vsub.f32 %v1537, %v1586
        %v1619 = vmul.f32 %v1587, 1.442695
        %v1620 = vpow.pop %v1619
        %v1621 = vmul.f32 %v1588, 1.442695
        %v1622 = vpow.pop %v1621
        %v1623 = vmul.f32 %v1589, 1.442695
        %v1624 = vpow.pop %v1623
        %v1625 = vmul.f32 %v1590, 1.442695
        %v1626 = vpow.pop %v1625
        %v1627 = vmul.f32 %v1591, 1.442695
        %v1628 = vpow.pop %v1627
        %v1629 = vmul.f32 %v1592, 1.442695
        %v1630 = vpow.pop %v1629
        %v1631 = vmul.f32 %v1593, 1.442695
        %v1632 = vpow.pop %v1631
        %v1633 = vmul.f32 %v1594, 1.442695
        %v1634 = vpow.pop %v1633
        %v1635 = vmul.f32 %v1595, 1.442695
        %v1636 = vpow.pop %v1635
        %v1637 = vmul.f32 %v1596, 1.442695
        %v1638 = vpow.pop %v1637
        %v1639 = vmul.f32 %v1597, 1.442695
        %v1640 = vpow.pop %v1639
        %v1641 = vmul.f32 %v1598, 1.442695
        %v1642 = vpow.pop %v1641
        %v1643 = vmul.f32 %v1599, 1.442695
        %v1644 = vpow.pop %v1643
        %v1645 = vmul.f32 %v1600, 1.442695
        %v1646 = vpow.pop %v1645
        %v1647 = vmul.f32 %v1601, 1.442695
        %v1648 = vpow.pop %v1647
        %v1649 = vmul.f32 %v1602, 1.442695
        %v1650 = vpow.pop %v1649
        %v1651 = vmul.f32 %v1603, 1.442695
        %v1652 = vpow.pop %v1651
        %v1653 = vmul.f32 %v1604, 1.442695
        %v1654 = vpow.pop %v1653
        %v1655 = vmul.f32 %v1605, 1.442695
        %v1656 = vpow.pop %v1655
        %v1657 = vmul.f32 %v1606, 1.442695
        %v1658 = vpow.pop %v1657
        %v1659 = vmul.f32 %v1607, 1.442695
        %v1660 = vpow.pop %v1659
        %v1661 = vmul.f32 %v1608, 1.442695
        %v1662 = vpow.pop %v1661
        %v1663 = vmul.f32 %v1609, 1.442695
        %v1664 = vpow.pop %v1663
        %v1665 = vmul.f32 %v1610, 1.442695
        %v1666 = vpow.pop %v1665
        %v1667 = vmul.f32 %v1611, 1.442695
        %v1668 = vpow.pop %v1667
        %v1669 = vmul.f32 %v1612, 1.442695
        %v1670 = vpow.pop %v1669
        %v1671 = vmul.f32 %v1613, 1.442695
        %v1672 = vpow.pop %v1671
        %v1673 = vmul.f32 %v1614, 1.442695
        %v1674 = vpow.pop %v1673
        %v1675 = vmul.f32 %v1615, 1.442695
        %v1676 = vpow.pop %v1675
        %v1677 = vmul.f32 %v1616, 1.442695
        %v1678 = vpow.pop %v1677
        %v1679 = vmul.f32 %v1617, 1.442695
        %v1680 = vpow.pop %v1679
        %v1681 = vmul.f32 %v1618, 1.442695
        %v1682 = vpow.pop %v1681
        %v1683 = vadd.f32 %v1620, %v1622
        %1684 = vadd.xlane.f32.xlu0 %v1683
        %v1685 = vpop.xlane.xlu0 %1684
        %v1686 = vadd.f32 %v1624, %v1626
        %1687 = vadd.xlane.f32.xlu0 %v1686
        %v1688 = vpop.xlane.xlu0 %1687
        %v1689 = vadd.f32 %v1628, %v1630
        %1690 = vadd.xlane.f32.xlu0 %v1689
        %v1691 = vpop.xlane.xlu0 %1690
        %v1692 = vadd.f32 %v1632, %v1634
        %1693 = vadd.xlane.f32.xlu0 %v1692
        %v1694 = vpop.xlane.xlu0 %1693
        %v1695 = vadd.f32 %v1636, %v1638
        %1696 = vadd.xlane.f32.xlu0 %v1695
        %v1697 = vpop.xlane.xlu0 %1696
        %v1698 = vadd.f32 %v1640, %v1642
        %1699 = vadd.xlane.f32.xlu0 %v1698
        %v1700 = vpop.xlane.xlu0 %1699
        %v1701 = vadd.f32 %v1644, %v1646
        %1702 = vadd.xlane.f32.xlu0 %v1701
        %v1703 = vpop.xlane.xlu0 %1702
        %v1704 = vadd.f32 %v1648, %v1650
        %1705 = vadd.xlane.f32.xlu0 %v1704
        %v1706 = vpop.xlane.xlu0 %1705
        %v1707 = vadd.f32 %v1652, %v1654
        %1708 = vadd.xlane.f32.xlu0 %v1707
        %v1709 = vpop.xlane.xlu0 %1708
        %v1710 = vadd.f32 %v1656, %v1658
        %1711 = vadd.xlane.f32.xlu0 %v1710
        %v1712 = vpop.xlane.xlu0 %1711
        %v1713 = vadd.f32 %v1660, %v1662
        %1714 = vadd.xlane.f32.xlu0 %v1713
        %v1715 = vpop.xlane.xlu0 %1714
        %v1716 = vadd.f32 %v1664, %v1666
        %1717 = vadd.xlane.f32.xlu0 %v1716
        %v1718 = vpop.xlane.xlu0 %1717
        %v1719 = vadd.f32 %v1668, %v1670
        %1720 = vadd.xlane.f32.xlu0 %v1719
        %v1721 = vpop.xlane.xlu0 %1720
        %v1722 = vadd.f32 %v1672, %v1674
        %1723 = vadd.xlane.f32.xlu0 %v1722
        %v1724 = vpop.xlane.xlu0 %1723
        %v1725 = vadd.f32 %v1676, %v1678
        %1726 = vadd.xlane.f32.xlu0 %v1725
        %v1727 = vpop.xlane.xlu0 %1726
        %v1728 = vadd.f32 %v1680, %v1682
        %1729 = vadd.xlane.f32.xlu0 %v1728
        %v1730 = vpop.xlane.xlu0 %1729
        %v1731 = vlog2.pop %v1685
        %v1732 = vmul.f32 %v1731, 0.6931472
        %v1733 = vlog2.pop %v1688
        %v1734 = vmul.f32 %v1733, 0.6931472
        %v1735 = vlog2.pop %v1691
        %v1736 = vmul.f32 %v1735, 0.6931472
        %v1737 = vlog2.pop %v1694
        %v1738 = vmul.f32 %v1737, 0.6931472
        %v1739 = vlog2.pop %v1697
        %v1740 = vmul.f32 %v1739, 0.6931472
        %v1741 = vlog2.pop %v1700
        %v1742 = vmul.f32 %v1741, 0.6931472
        %v1743 = vlog2.pop %v1703
        %v1744 = vmul.f32 %v1743, 0.6931472
        %v1745 = vlog2.pop %v1706
        %v1746 = vmul.f32 %v1745, 0.6931472
        %v1747 = vlog2.pop %v1709
        %v1748 = vmul.f32 %v1747, 0.6931472
        %v1749 = vlog2.pop %v1712
        %v1750 = vmul.f32 %v1749, 0.6931472
        %v1751 = vlog2.pop %v1715
        %v1752 = vmul.f32 %v1751, 0.6931472
        %v1753 = vlog2.pop %v1718
        %v1754 = vmul.f32 %v1753, 0.6931472
        %v1755 = vlog2.pop %v1721
        %v1756 = vmul.f32 %v1755, 0.6931472
        %v1757 = vlog2.pop %v1724
        %v1758 = vmul.f32 %v1757, 0.6931472
        %v1759 = vlog2.pop %v1727
        %v1760 = vmul.f32 %v1759, 0.6931472
        %v1761 = vlog2.pop %v1730
        %v1762 = vmul.f32 %v1761, 0.6931472
        %v1763 = vadd.f32 %v1541, %v1732
        %v1764 = vadd.f32 %v1544, %v1734
        %v1765 = vadd.f32 %v1547, %v1736
        %v1766 = vadd.f32 %v1550, %v1738
        %v1767 = vadd.f32 %v1553, %v1740
        %v1768 = vadd.f32 %v1556, %v1742
        %v1769 = vadd.f32 %v1559, %v1744
        %v1770 = vadd.f32 %v1562, %v1746
        %v1771 = vadd.f32 %v1565, %v1748
        %v1772 = vadd.f32 %v1568, %v1750
        %v1773 = vadd.f32 %v1571, %v1752
        %v1774 = vadd.f32 %v1574, %v1754
        %v1775 = vadd.f32 %v1577, %v1756
        %v1776 = vadd.f32 %v1580, %v1758
        %v1777 = vadd.f32 %v1583, %v1760
        %v1778 = vadd.f32 %v1586, %v1762
        %v1779 = vsub.f32 %v1451, %v1763
        %v1780 = vsub.f32 %v1500, %v1763
        %v1781 = vsub.f32 %v1453, %v1764
        %v1782 = vsub.f32 %v1502, %v1764
        %v1783 = vsub.f32 %v1456, %v1765
        %v1784 = vsub.f32 %v1505, %v1765
        %v1785 = vsub.f32 %v1458, %v1766
        %v1786 = vsub.f32 %v1507, %v1766
        %v1787 = vsub.f32 %v1461, %v1767
        %v1788 = vsub.f32 %v1510, %v1767
        %v1789 = vsub.f32 %v1463, %v1768
        %v1790 = vsub.f32 %v1512, %v1768
        %v1791 = vsub.f32 %v1466, %v1769
        %v1792 = vsub.f32 %v1515, %v1769
        %v1793 = vsub.f32 %v1468, %v1770
        %v1794 = vsub.f32 %v1517, %v1770
        %v1795 = vsub.f32 %v1471, %v1771
        %v1796 = vsub.f32 %v1520, %v1771
        %v1797 = vsub.f32 %v1473, %v1772
        %v1798 = vsub.f32 %v1522, %v1772
        %v1799 = vsub.f32 %v1476, %v1773
        %v1800 = vsub.f32 %v1525, %v1773
        %v1801 = vsub.f32 %v1478, %v1774
        %v1802 = vsub.f32 %v1527, %v1774
        %v1803 = vsub.f32 %v1481, %v1775
        %v1804 = vsub.f32 %v1530, %v1775
        %v1805 = vsub.f32 %v1483, %v1776
        %v1806 = vsub.f32 %v1532, %v1776
        %v1807 = vsub.f32 %v1486, %v1777
        %v1808 = vsub.f32 %v1535, %v1777
        %v1809 = vsub.f32 %v1488, %v1778
        %v1810 = vsub.f32 %v1537, %v1778
        %1811 = vst [vmem:[%s245] sm:$0xff] %v1779
        %1812 = vst [vmem:[%s245 + $0x8] sm:$0xff] %v1780
        %1813 = vst [vmem:[%s245 + $0x10] sm:$0xff] %v1781
        %1814 = vst [vmem:[%s245 + $0x18] sm:$0xff] %v1782
        %1815 = vst [vmem:[%s245 + $0x20] sm:$0xff] %v1783
        %1816 = vst [vmem:[%s245 + $0x28] sm:$0xff] %v1784
        %1817 = vst [vmem:[%s245 + $0x30] sm:$0xff] %v1785
        %1818 = vst [vmem:[%s245 + $0x38] sm:$0xff] %v1786
        %1819 = vst [vmem:[%s245 + $0x40] sm:$0xff] %v1787
        %1820 = vst [vmem:[%s245 + $0x48] sm:$0xff] %v1788
        %1821 = vst [vmem:[%s245 + $0x50] sm:$0xff] %v1789
        %1822 = vst [vmem:[%s245 + $0x58] sm:$0xff] %v1790
        %1823 = vst [vmem:[%s245 + $0x60] sm:$0xff] %v1791
        %1824 = vst [vmem:[%s245 + $0x68] sm:$0xff] %v1792
        %1825 = vst [vmem:[%s245 + $0x70] sm:$0xff] %v1793
        %1826 = vst [vmem:[%s245 + $0x78] sm:$0xff] %v1794
        %1827 = vst [vmem:[%s245 + $0x80] sm:$0xff] %v1795
        %1828 = vst [vmem:[%s245 + $0x88] sm:$0xff] %v1796
        %1829 = vst [vmem:[%s245 + $0x90] sm:$0xff] %v1797
        %1830 = vst [vmem:[%s245 + $0x98] sm:$0xff] %v1798
        %1831 = vst [vmem:[%s245 + $0xa0] sm:$0xff] %v1799
        %1832 = vst [vmem:[%s245 + $0xa8] sm:$0xff] %v1800
        %1833 = vst [vmem:[%s245 + $0xb0] sm:$0xff] %v1801
        %1834 = vst [vmem:[%s245 + $0xb8] sm:$0xff] %v1802
        %1835 = vst [vmem:[%s245 + $0xc0] sm:$0xff] %v1803
        %1836 = vst [vmem:[%s245 + $0xc8] sm:$0xff] %v1804
        %1837 = vst [vmem:[%s245 + $0xd0] sm:$0xff] %v1805
        %1838 = vst [vmem:[%s245 + $0xd8] sm:$0xff] %v1806
        %1839 = vst [vmem:[%s245 + $0xe0] sm:$0xff] %v1807
        %1840 = vst [vmem:[%s245 + $0xe8] sm:$0xff] %v1808
        %1841 = vst [vmem:[%s245 + $0xf0] sm:$0xff] %v1809
        %1842 = vst [vmem:[%s245 + $0xf8] sm:$0xff] %v1810
        %s1843 = sand.u32 %s159, 1
        %s1844 = scalar_lea.sflag [#allocation3], %s1843
        %s1845 = sand.u32 %s159, 1
        %s1846 = smul.addr %s1845, 256
        %s1847 = scalar_lea.vmem [#allocation2], %s1846
        // Predicated region
        $region45: #{tpu_custom_call.1} parent=43 // pred_check
          %p1848 = pneg %p169
        $region46: #{tpu_custom_call.1} parent=43 // pred_check_branch
          %1850 = sbr.rel (%p1848) target = $region48
        $region47: #{tpu_custom_call.1} parent=43 // pred_region
          %s1851 = smul.u32 16, %s20
          %1853 = vsyncadd %s1844, 0
          %s1854 = smul.addr %s1851, 2
          %s1855 = smul.addr %s1854, 8
          %s1856 = scalar_lea.hbm %s6, %s1855
          %s1857 = sshll.u32 %s1847, 4
          %s1858 = int_to_ptr.vmem [resolvable:$true] %s1857
          %s1859 = sshll.u32 %s1856, 4
          %s1860 = int_to_ptr.hbm [resolvable:$true] %s1859
          %1865 = dma.vmem_to_hbm [thread:$0]  %s1858, 4096, %s1860, %s1844, 256, 256, 16
        $region48: #{tpu_custom_call.1} parent=43 // pred_fallthru
          _
      $region44: #{tpu_custom_call.1} parent=5 // pred_fallthru
        _
      %p1866 = scmp.le.s32.totalorder 2, %s15
      // Predicated region
      $region49: #{tpu_custom_call.1} parent=5 // pred_check
        %p1867 = pneg %p1866
      $region50: #{tpu_custom_call.1} parent=5 // pred_check_branch
        %1869 = sbr.rel (%p1867) target = $region52
      $region51: #{tpu_custom_call.1} parent=5 // pred_region
        %s1870 = ssub.s32 %s15, 2
        // Predicated region
        $region53: #{tpu_custom_call.1} parent=51 // pred_check
          %p1871 = pneg %p175
        $region54: #{tpu_custom_call.1} parent=51 // pred_check_branch
          %1873 = sbr.rel (%p1871) target = $region56
        $region55: #{tpu_custom_call.1} parent=51 // pred_region
          %s1874 = sand.u32 %s160, 1
          %s1875 = scalar_lea.sflag [#allocation3], %s1874
          %s1876 = sand.u32 %s160, 1
          %s1877 = smul.addr %s1876, 256
          %s1878 = scalar_lea.vmem [#allocation2], %s1877
          %1880 = dma.done %s1875, 4096
        $region56: #{tpu_custom_call.1} parent=51 // pred_fallthru
          _
      $region52: #{tpu_custom_call.1} parent=5 // pred_fallthru
        _
    $region6: #{tpu_custom_call.1} parent=1 // loop_footer
      %s19 = sadd.s32 1, %s15
    $region7: #{tpu_custom_call.1} parent=1 // loop_footer_branch
      %14 = sbr.rel target = $region3
    $region8: #{tpu_custom_call.1} parent=1 // loop_exit
      _
    %1881 = vsyncpa [#allocation3], 1
    %s1882 = scalar_lea.sflag [#allocation3], 1
    %1883 = vsyncpa %s1882, 1

</llo_original>
